<compile_context>
chip_gen: v5e
topology: v5e:2x2
jax: 0.10.0
libtpu: 0.0.40
codegen_flags: <defaults>
</compile_context>

<pallas_src>
import functools

import jax
import jax.numpy as jnp
from jax import lax
from jax.experimental import pallas as pl
from jax.experimental.pallas import tpu as pltpu


def _round_up(x, m):
    return (x + m - 1) // m * m


def _pad_gate_cols(w, h, h_pad):
    """(K, 3h) -> (K, 3*h_pad): place each gate's h columns at lane-aligned offsets."""
    k = w.shape[0]
    out = jnp.zeros((k, 3 * h_pad), w.dtype)
    for g in range(3):
        out = out.at[:, g * h_pad:g * h_pad + h].set(w[:, g * h:(g + 1) * h])
    return out


def _gru_recurrence_kernel(gi_ref, w_hh_ref, b_hh_n_ref, h_all_ref, h_ref, *,
                           tc, hidden_pad):
    """Serial GRU recurrence over one time-chunk of `tc` steps.

    gi_ref     : (tc, Bblk, 3*Hp)  precomputed LN(x) @ W_ih + b_ih (+ b_hh r/z lanes)
    w_hh_ref   : (Hp, 3*Hp)        hidden->gates weight, pre-transposed & padded
    b_hh_n_ref : (1, Hp)           hidden bias for the n-gate only
    h_all_ref  : (tc, Bblk, Hp)    per-step hidden states (output)
    h_ref      : (Bblk, Hp)        VMEM scratch carrying h across time-chunks
    """
    hp = hidden_pad
    t_chunk = pl.program_id(1)

    @pl.when(t_chunk == 0)
    def _():
        h_ref[...] = jnp.zeros_like(h_ref)

    w_hh = w_hh_ref[...]
    # Hoist the bias broadcast out of the unrolled loop (broadcasts are not CSE'd).
    b_n = jnp.broadcast_to(b_hh_n_ref[...], (h_ref.shape[0], hp))

    def step(i, h):
        gi = gi_ref[i]                                                 # (Bblk, 3Hp)
        gh = jnp.dot(h.astype(w_hh.dtype), w_hh,
                     preferred_element_type=jnp.float32)               # (Bblk, 3Hp)
        # Gate slices are lane-aligned because Hp is a multiple of 128.
        r = jax.nn.sigmoid(gi[:, 0 * hp:1 * hp] + gh[:, 0 * hp:1 * hp])
        z = jax.nn.sigmoid(gi[:, 1 * hp:2 * hp] + gh[:, 1 * hp:2 * hp])
        n = jnp.tanh(gi[:, 2 * hp:3 * hp] + r * (gh[:, 2 * hp:3 * hp] + b_n))
        h_new = (1.0 - z) * n + z * h
        h_all_ref[i] = h_new
        return h_new

    h_ref[...] = lax.fori_loop(0, tc, step, h_ref[...], unroll=True)


def rnn_layer_forward(x, params, *, eps=1e-5, time_chunk=8, batch_chunks=None,
                      matmul_dtype=jnp.float32):
    """x: (B, T, D) batch-first, like the PyTorch module. Returns (B, T, D)."""
    B, T, D = x.shape
    H = params["w_hh"].shape[0] // 3

    Bp = _round_up(max(B, 8), 8)        # sublane-align batch
    Hp = _round_up(max(H, 128), 128)    # lane-align hidden so gate slices hit 128-lane bounds
    Tc = time_chunk
    Tp = _round_up(T, Tc)

    # --- pad / transpose weights once (gate order r, z, n kept) -------------
    w_ih_p = _pad_gate_cols(params["w_ih"].T, H, Hp)                     # (D, 3Hp)
    w_hh_p = _pad_gate_cols(params["w_hh"].T, H, Hp)                     # (H, 3Hp)
    w_hh_p = jnp.pad(w_hh_p, ((0, Hp - H), (0, 0)))                      # (Hp, 3Hp)
    b_ih_p = _pad_gate_cols(params["b_ih"][None, :], H, Hp)              # (1, 3Hp)
    b_hh_p = _pad_gate_cols(params["b_hh"][None, :], H, Hp)              # (1, 3Hp)
    gi_bias = b_ih_p + b_hh_p.at[:, 2 * Hp:].set(0.0)                    # fold b_hh r/z lanes
    b_hh_n = b_hh_p[:, 2 * Hp:3 * Hp]                                    # (1, Hp)

    # --- hoisted LayerNorm + input projection (one MXU-shaped matmul), ------
    # --- produced directly time-major so no explicit transpose pass ---------
    xf = x.astype(jnp.float32)
    mean = jnp.mean(xf, axis=-1, keepdims=True)
    var = jnp.mean((xf - mean) ** 2, axis=-1, keepdims=True)
    x_ln = (xf - mean) * lax.rsqrt(var + eps)
    gi = jnp.einsum('btd,dg->tbg',
                    x_ln.astype(matmul_dtype), w_ih_p.astype(matmul_dtype),
                    preferred_element_type=jnp.float32) + gi_bias[None]   # (T, B, 3Hp)
    gi = jnp.pad(gi, ((0, Tp - T), (0, Bp - B), (0, 0)))                  # (Tp, Bp, 3Hp)

    # --- batch chunking: the 'parallel' axis that lets v7x's 2 TCs split B ---
    if batch_chunks is None:
        batch_chunks = 2 if Bp % 16 == 0 else 1
    b_blk = Bp // batch_chunks
    n_tc = Tp // Tc

    kernel = functools.partial(_gru_recurrence_kernel, tc=Tc, hidden_pad=Hp)

    h_all = pl.pallas_call(
        kernel,
        out_shape=jax.ShapeDtypeStruct((Tp, Bp, Hp), jnp.float32),
        grid_spec=pltpu.PrefetchScalarGridSpec(
            num_scalar_prefetch=0,
            grid=(batch_chunks, n_tc),
            in_specs=[
                pl.BlockSpec((Tc, b_blk, 3 * Hp), lambda b, t: (t, b, 0)),   # gi chunk
                pl.BlockSpec((Hp, 3 * Hp), lambda b, t: (0, 0)),             # w_hh (resident)
                pl.BlockSpec((1, Hp), lambda b, t: (0, 0)),                  # b_hh (n gate)
            ],
            out_specs=pl.BlockSpec((Tc, b_blk, Hp), lambda b, t: (t, b, 0)),
            scratch_shapes=[pltpu.VMEM((b_blk, Hp), jnp.float32)],           # carried h
        ),
        compiler_params=pltpu.CompilerParams(
            dimension_semantics=("parallel", "arbitrary"),   # batch || , time = serial recurrence
            vmem_limit_bytes=32 * 1024 * 1024,
        ),
    )(gi, w_hh_p.astype(matmul_dtype), b_hh_n)

    # --- hoisted output Linear + residual (one MXU-shaped matmul, fuses the ---
    # --- time-major -> batch-major transpose) ---------------------------------
    h_trim = h_all[:T, :B, :H]
    y = jnp.einsum('tbh,hd->btd',
                   h_trim.astype(matmul_dtype), params["w_out"].T.astype(matmul_dtype),
                   preferred_element_type=jnp.float32) + params["b_out"]
    return (xf + y).astype(x.dtype)


def rnn_layer_reference(x, params, *, eps=1e-5):
    """Pure-JAX reference mirroring the PyTorch forward, for validation."""
    H = params["w_hh"].shape[0] // 3
    mean = jnp.mean(x, axis=-1, keepdims=True)
    var = jnp.mean((x - mean) ** 2, axis=-1, keepdims=True)
    x_ln = (x - mean) * lax.rsqrt(var + eps)

    w_ih, w_hh = params["w_ih"], params["w_hh"]
    b_ih, b_hh = params["b_ih"], params["b_hh"]

    def cell(h, xt):
        gi = xt @ w_ih.T + b_ih
        gh = h @ w_hh.T + b_hh
        r = jax.nn.sigmoid(gi[:, :H] + gh[:, :H])
        z = jax.nn.sigmoid(gi[:, H:2 * H] + gh[:, H:2 * H])
        n = jnp.tanh(gi[:, 2 * H:] + r * gh[:, 2 * H:])
        h_new = (1.0 - z) * n + z * h
        return h_new, h_new

    B, T, D = x.shape
    h0 = jnp.zeros((B, H), jnp.float32)
    _, hs = lax.scan(cell, h0, jnp.transpose(x_ln, (1, 0, 2)))
    hs = jnp.transpose(hs, (1, 0, 2))                       # (B, T, H)
    return x + hs @ params["w_out"].T + params["b_out"]


def init_params(key, input_size, hidden_size):
    """Deterministic synthetic init (uniform, PyTorch-like scale)."""
    ks = jax.random.split(key, 6)
    s = 1.0 / jnp.sqrt(hidden_size)
    u = lambda k, shape, scale: jax.random.uniform(
        k, shape, jnp.float32, minval=-scale, maxval=scale)
    return {
        "w_ih": u(ks[0], (3 * hidden_size, input_size), s),
        "w_hh": u(ks[1], (3 * hidden_size, hidden_size), s),
        "b_ih": u(ks[2], (3 * hidden_size,), s),
        "b_hh": u(ks[3], (3 * hidden_size,), s),
        "w_out": u(ks[4], (input_size, hidden_size), s),
        "b_out": u(ks[5], (input_size,), s),
    }


if __name__ == "__main__":
    B, T, D, H = 4, 8, 32, 32   # batch, seq, input_size, hidden_size
    # TODO(synk): dropout is a no-op at p=0 / eval; not implemented.

    key = jax.random.PRNGKey(0)
    kx, kp = jax.random.split(key)
    x = jax.random.normal(kx, (B, T, D), jnp.float32)
    params = init_params(kp, D, H)

    fwd = jax.jit(rnn_layer_forward)
    out = jax.block_until_ready(fwd(x, params))
    ref = jax.block_until_ready(rnn_layer_reference(x, params))

    assert out.shape == (B, T, D)
    assert jnp.allclose(out, ref, atol=1e-4, rtol=1e-4), "Pallas output mismatch vs reference"
    print("KERNEL_OK")
</pallas_src>

<mosaic_0001>
module attributes {stable_mosaic.version = 11 : i64} {
  func.func @_gru_recurrence_kernel(%arg0: i32, %arg1: i32, %arg2: memref<8x8x384xf32, #tpu.memory_space<vmem>>, %arg3: memref<128x384xf32, #tpu.memory_space<vmem>>, %arg4: memref<1x128xf32, #tpu.memory_space<vmem>>, %arg5: memref<8x8x128xf32, #tpu.memory_space<vmem>>, %arg6: memref<8x128xf32, #tpu.memory_space<vmem>>) attributes {dimension_semantics = [#tpu.dimension_semantics<parallel>, #tpu.dimension_semantics<arbitrary>], iteration_bounds = array<i64: 1, 1>, scalar_prefetch = 0 : i64, scratch_operands = 1 : i64, tpu.core_type = #tpu.core_type<tc>, window_params = [{transform_indices = @transform_0, window_bounds = array<i64: 8, 8, 384>}, {pipeline_mode = #tpu.pipeline_mode<synchronous>, transform_indices = @transform_1, window_bounds = array<i64: 128, 384>}, {pipeline_mode = #tpu.pipeline_mode<synchronous>, transform_indices = @transform_2, window_bounds = array<i64: 1, 128>}, {transform_indices = @transform_3, window_bounds = array<i64: 8, 8, 128>}]} {
    %c0_i32 = arith.constant 0 : i32
    %0 = arith.cmpi eq, %arg1, %c0_i32 : i32
    %1 = arith.extui %0 : i1 to i32
    %c0_i32_0 = arith.constant 0 : i32
    %2 = arith.cmpi ne, %1, %c0_i32_0 : i32
    scf.if %2 {
      %cst_72 = arith.constant 0.000000e+00 : f32
      %289 = vector.broadcast %cst_72 : f32 to vector<8x128xf32>
      %c0_73 = arith.constant 0 : index
      %c0_74 = arith.constant 0 : index
      %290 = vector.load %arg6[%c0_73, %c0_74] : memref<8x128xf32, #tpu.memory_space<vmem>>, vector<8x128xf32>
      tpu.vector_store %arg6[%c0_73, %c0_74], %289 {strides = array<i32>} : memref<8x128xf32, #tpu.memory_space<vmem>>, vector<8x128xf32>,
    } else {
    }
    %c0 = arith.constant 0 : index
    %c0_1 = arith.constant 0 : index
    %3 = vector.load %arg3[%c0, %c0_1] : memref<128x384xf32, #tpu.memory_space<vmem>>, vector<128x384xf32>
    %c0_2 = arith.constant 0 : index
    %c0_3 = arith.constant 0 : index
    %4 = vector.load %arg4[%c0_2, %c0_3] : memref<1x128xf32, #tpu.memory_space<vmem>>, vector<1x128xf32>
    %5 = vector.shape_cast %4 : vector<1x128xf32> to vector<1x128xf32>
    %6 = vector.broadcast %5 : vector<1x128xf32> to vector<8x128xf32>
    %c0_4 = arith.constant 0 : index
    %c0_5 = arith.constant 0 : index
    %7 = vector.load %arg6[%c0_4, %c0_5] : memref<8x128xf32, #tpu.memory_space<vmem>>, vector<8x128xf32>
    %c0_i32_6 = arith.constant 0 : i32
    %8 = arith.index_cast %c0_i32_6 : i32 to index
    %c0_7 = arith.constant 0 : index
    %c0_8 = arith.constant 0 : index
    %9 = vector.load %arg2[%8, %c0_7, %c0_8] : memref<8x8x384xf32, #tpu.memory_space<vmem>>, vector<1x8x384xf32>
    %10 = vector.shape_cast %9 : vector<1x8x384xf32> to vector<8x384xf32>
    %cst = arith.constant dense<0.000000e+00> : vector<8x384xf32>
    %11 = tpu.matmul %7, %3, %cst {dimension_numbers = #tpu.dot_dimension_numbers<[1], [0], [0], [1], [0, 0, 1, 1], [], []>} : vector<8x128xf32>, vector<128x384xf32>, vector<8x384xf32> -> vector<8x384xf32>
    %12 = vector.extract_strided_slice %10 {offsets = [0, 0], sizes = [8, 128], strides = [1, 1]} : vector<8x384xf32> to vector<8x128xf32>
    %13 = vector.extract_strided_slice %11 {offsets = [0, 0], sizes = [8, 128], strides = [1, 1]} : vector<8x384xf32> to vector<8x128xf32>
    %14 = arith.addf %12, %13 : vector<8x128xf32>
    %15 = arith.negf %14 : vector<8x128xf32>
    %16 = math.exp %15 : vector<8x128xf32>
    %cst_9 = arith.constant 1.000000e+00 : f32
    %17 = vector.broadcast %cst_9 : f32 to vector<8x128xf32>
    %18 = arith.addf %17, %16 : vector<8x128xf32>
    %19 = arith.divf %17, %18 : vector<8x128xf32>
    %20 = vector.extract_strided_slice %10 {offsets = [0, 128], sizes = [8, 128], strides = [1, 1]} : vector<8x384xf32> to vector<8x128xf32>
    %21 = vector.extract_strided_slice %11 {offsets = [0, 128], sizes = [8, 128], strides = [1, 1]} : vector<8x384xf32> to vector<8x128xf32>
    %22 = arith.addf %20, %21 : vector<8x128xf32>
    %23 = arith.negf %22 : vector<8x128xf32>
    %24 = math.exp %23 : vector<8x128xf32>
    %cst_10 = arith.constant 1.000000e+00 : f32
    %25 = vector.broadcast %cst_10 : f32 to vector<8x128xf32>
    %26 = arith.addf %25, %24 : vector<8x128xf32>
    %27 = arith.divf %25, %26 : vector<8x128xf32>
    %28 = vector.extract_strided_slice %10 {offsets = [0, 256], sizes = [8, 128], strides = [1, 1]} : vector<8x384xf32> to vector<8x128xf32>
    %29 = vector.extract_strided_slice %11 {offsets = [0, 256], sizes = [8, 128], strides = [1, 1]} : vector<8x384xf32> to vector<8x128xf32>
    %30 = arith.addf %29, %6 : vector<8x128xf32>
    %31 = arith.mulf %19, %30 : vector<8x128xf32>
    %32 = arith.addf %28, %31 : vector<8x128xf32>
    %33 = math.tanh %32 : vector<8x128xf32>
    %cst_11 = arith.constant 1.000000e+00 : f32
    %34 = vector.broadcast %cst_11 : f32 to vector<8x128xf32>
    %35 = arith.subf %34, %27 : vector<8x128xf32>
    %36 = arith.mulf %35, %33 : vector<8x128xf32>
    %37 = arith.mulf %27, %7 : vector<8x128xf32>
    %38 = arith.addf %36, %37 : vector<8x128xf32>
    %39 = arith.index_cast %c0_i32_6 : i32 to index
    %c0_12 = arith.constant 0 : index
    %c0_13 = arith.constant 0 : index
    %40 = vector.load %arg5[%39, %c0_12, %c0_13] : memref<8x8x128xf32, #tpu.memory_space<vmem>>, vector<1x8x128xf32>
    %41 = vector.shape_cast %40 : vector<1x8x128xf32> to vector<8x128xf32>
    %42 = vector.shape_cast %38 : vector<8x128xf32> to vector<1x8x128xf32>
    tpu.vector_store %arg5[%39, %c0_12, %c0_13], %42 {strides = array<i32>} : memref<8x8x128xf32, #tpu.memory_space<vmem>>, vector<1x8x128xf32>,
    %c1_i32 = arith.constant 1 : i32
    %43 = arith.index_cast %c1_i32 : i32 to index
    %c0_14 = arith.constant 0 : index
    %c0_15 = arith.constant 0 : index
    %44 = vector.load %arg2[%43, %c0_14, %c0_15] : memref<8x8x384xf32, #tpu.memory_space<vmem>>, vector<1x8x384xf32>
    %45 = vector.shape_cast %44 : vector<1x8x384xf32> to vector<8x384xf32>
    %cst_16 = arith.constant dense<0.000000e+00> : vector<8x384xf32>
    %46 = tpu.matmul %38, %3, %cst_16 {dimension_numbers = #tpu.dot_dimension_numbers<[1], [0], [0], [1], [0, 0, 1, 1], [], []>} : vector<8x128xf32>, vector<128x384xf32>, vector<8x384xf32> -> vector<8x384xf32>
    %47 = vector.extract_strided_slice %45 {offsets = [0, 0], sizes = [8, 128], strides = [1, 1]} : vector<8x384xf32> to vector<8x128xf32>
    %48 = vector.extract_strided_slice %46 {offsets = [0, 0], sizes = [8, 128], strides = [1, 1]} : vector<8x384xf32> to vector<8x128xf32>
    %49 = arith.addf %47, %48 : vector<8x128xf32>
    %50 = arith.negf %49 : vector<8x128xf32>
    %51 = math.exp %50 : vector<8x128xf32>
    %cst_17 = arith.constant 1.000000e+00 : f32
    %52 = vector.broadcast %cst_17 : f32 to vector<8x128xf32>
    %53 = arith.addf %52, %51 : vector<8x128xf32>
    %54 = arith.divf %52, %53 : vector<8x128xf32>
    %55 = vector.extract_strided_slice %45 {offsets = [0, 128], sizes = [8, 128], strides = [1, 1]} : vector<8x384xf32> to vector<8x128xf32>
    %56 = vector.extract_strided_slice %46 {offsets = [0, 128], sizes = [8, 128], strides = [1, 1]} : vector<8x384xf32> to vector<8x128xf32>
    %57 = arith.addf %55, %56 : vector<8x128xf32>
    %58 = arith.negf %57 : vector<8x128xf32>
    %59 = math.exp %58 : vector<8x128xf32>
    %cst_18 = arith.constant 1.000000e+00 : f32
    %60 = vector.broadcast %cst_18 : f32 to vector<8x128xf32>
    %61 = arith.addf %60, %59 : vector<8x128xf32>
    %62 = arith.divf %60, %61 : vector<8x128xf32>
    %63 = vector.extract_strided_slice %45 {offsets = [0, 256], sizes = [8, 128], strides = [1, 1]} : vector<8x384xf32> to vector<8x128xf32>
    %64 = vector.extract_strided_slice %46 {offsets = [0, 256], sizes = [8, 128], strides = [1, 1]} : vector<8x384xf32> to vector<8x128xf32>
    %65 = arith.addf %64, %6 : vector<8x128xf32>
    %66 = arith.mulf %54, %65 : vector<8x128xf32>
    %67 = arith.addf %63, %66 : vector<8x128xf32>
    %68 = math.tanh %67 : vector<8x128xf32>
    %cst_19 = arith.constant 1.000000e+00 : f32
    %69 = vector.broadcast %cst_19 : f32 to vector<8x128xf32>
    %70 = arith.subf %69, %62 : vector<8x128xf32>
    %71 = arith.mulf %70, %68 : vector<8x128xf32>
    %72 = arith.mulf %62, %38 : vector<8x128xf32>
    %73 = arith.addf %71, %72 : vector<8x128xf32>
    %74 = arith.index_cast %c1_i32 : i32 to index
    %c0_20 = arith.constant 0 : index
    %c0_21 = arith.constant 0 : index
    %75 = vector.load %arg5[%74, %c0_20, %c0_21] : memref<8x8x128xf32, #tpu.memory_space<vmem>>, vector<1x8x128xf32>
    %76 = vector.shape_cast %75 : vector<1x8x128xf32> to vector<8x128xf32>
    %77 = vector.shape_cast %73 : vector<8x128xf32> to vector<1x8x128xf32>
    tpu.vector_store %arg5[%74, %c0_20, %c0_21], %77 {strides = array<i32>} : memref<8x8x128xf32, #tpu.memory_space<vmem>>, vector<1x8x128xf32>,
    %c2_i32 = arith.constant 2 : i32
    %78 = arith.index_cast %c2_i32 : i32 to index
    %c0_22 = arith.constant 0 : index
    %c0_23 = arith.constant 0 : index
    %79 = vector.load %arg2[%78, %c0_22, %c0_23] : memref<8x8x384xf32, #tpu.memory_space<vmem>>, vector<1x8x384xf32>
    %80 = vector.shape_cast %79 : vector<1x8x384xf32> to vector<8x384xf32>
    %cst_24 = arith.constant dense<0.000000e+00> : vector<8x384xf32>
    %81 = tpu.matmul %73, %3, %cst_24 {dimension_numbers = #tpu.dot_dimension_numbers<[1], [0], [0], [1], [0, 0, 1, 1], [], []>} : vector<8x128xf32>, vector<128x384xf32>, vector<8x384xf32> -> vector<8x384xf32>
    %82 = vector.extract_strided_slice %80 {offsets = [0, 0], sizes = [8, 128], strides = [1, 1]} : vector<8x384xf32> to vector<8x128xf32>
    %83 = vector.extract_strided_slice %81 {offsets = [0, 0], sizes = [8, 128], strides = [1, 1]} : vector<8x384xf32> to vector<8x128xf32>
    %84 = arith.addf %82, %83 : vector<8x128xf32>
    %85 = arith.negf %84 : vector<8x128xf32>
    %86 = math.exp %85 : vector<8x128xf32>
    %cst_25 = arith.constant 1.000000e+00 : f32
    %87 = vector.broadcast %cst_25 : f32 to vector<8x128xf32>
    %88 = arith.addf %87, %86 : vector<8x128xf32>
    %89 = arith.divf %87, %88 : vector<8x128xf32>
    %90 = vector.extract_strided_slice %80 {offsets = [0, 128], sizes = [8, 128], strides = [1, 1]} : vector<8x384xf32> to vector<8x128xf32>
    %91 = vector.extract_strided_slice %81 {offsets = [0, 128], sizes = [8, 128], strides = [1, 1]} : vector<8x384xf32> to vector<8x128xf32>
    %92 = arith.addf %90, %91 : vector<8x128xf32>
    %93 = arith.negf %92 : vector<8x128xf32>
    %94 = math.exp %93 : vector<8x128xf32>
    %cst_26 = arith.constant 1.000000e+00 : f32
    %95 = vector.broadcast %cst_26 : f32 to vector<8x128xf32>
    %96 = arith.addf %95, %94 : vector<8x128xf32>
    %97 = arith.divf %95, %96 : vector<8x128xf32>
    %98 = vector.extract_strided_slice %80 {offsets = [0, 256], sizes = [8, 128], strides = [1, 1]} : vector<8x384xf32> to vector<8x128xf32>
    %99 = vector.extract_strided_slice %81 {offsets = [0, 256], sizes = [8, 128], strides = [1, 1]} : vector<8x384xf32> to vector<8x128xf32>
    %100 = arith.addf %99, %6 : vector<8x128xf32>
    %101 = arith.mulf %89, %100 : vector<8x128xf32>
    %102 = arith.addf %98, %101 : vector<8x128xf32>
    %103 = math.tanh %102 : vector<8x128xf32>
    %cst_27 = arith.constant 1.000000e+00 : f32
    %104 = vector.broadcast %cst_27 : f32 to vector<8x128xf32>
    %105 = arith.subf %104, %97 : vector<8x128xf32>
    %106 = arith.mulf %105, %103 : vector<8x128xf32>
    %107 = arith.mulf %97, %73 : vector<8x128xf32>
    %108 = arith.addf %106, %107 : vector<8x128xf32>
    %109 = arith.index_cast %c2_i32 : i32 to index
    %c0_28 = arith.constant 0 : index
    %c0_29 = arith.constant 0 : index
    %110 = vector.load %arg5[%109, %c0_28, %c0_29] : memref<8x8x128xf32, #tpu.memory_space<vmem>>, vector<1x8x128xf32>
    %111 = vector.shape_cast %110 : vector<1x8x128xf32> to vector<8x128xf32>
    %112 = vector.shape_cast %108 : vector<8x128xf32> to vector<1x8x128xf32>
    tpu.vector_store %arg5[%109, %c0_28, %c0_29], %112 {strides = array<i32>} : memref<8x8x128xf32, #tpu.memory_space<vmem>>, vector<1x8x128xf32>,
    %c3_i32 = arith.constant 3 : i32
    %113 = arith.index_cast %c3_i32 : i32 to index
    %c0_30 = arith.constant 0 : index
    %c0_31 = arith.constant 0 : index
    %114 = vector.load %arg2[%113, %c0_30, %c0_31] : memref<8x8x384xf32, #tpu.memory_space<vmem>>, vector<1x8x384xf32>
    %115 = vector.shape_cast %114 : vector<1x8x384xf32> to vector<8x384xf32>
    %cst_32 = arith.constant dense<0.000000e+00> : vector<8x384xf32>
    %116 = tpu.matmul %108, %3, %cst_32 {dimension_numbers = #tpu.dot_dimension_numbers<[1], [0], [0], [1], [0, 0, 1, 1], [], []>} : vector<8x128xf32>, vector<128x384xf32>, vector<8x384xf32> -> vector<8x384xf32>
    %117 = vector.extract_strided_slice %115 {offsets = [0, 0], sizes = [8, 128], strides = [1, 1]} : vector<8x384xf32> to vector<8x128xf32>
    %118 = vector.extract_strided_slice %116 {offsets = [0, 0], sizes = [8, 128], strides = [1, 1]} : vector<8x384xf32> to vector<8x128xf32>
    %119 = arith.addf %117, %118 : vector<8x128xf32>
    %120 = arith.negf %119 : vector<8x128xf32>
    %121 = math.exp %120 : vector<8x128xf32>
    %cst_33 = arith.constant 1.000000e+00 : f32
    %122 = vector.broadcast %cst_33 : f32 to vector<8x128xf32>
    %123 = arith.addf %122, %121 : vector<8x128xf32>
    %124 = arith.divf %122, %123 : vector<8x128xf32>
    %125 = vector.extract_strided_slice %115 {offsets = [0, 128], sizes = [8, 128], strides = [1, 1]} : vector<8x384xf32> to vector<8x128xf32>
    %126 = vector.extract_strided_slice %116 {offsets = [0, 128], sizes = [8, 128], strides = [1, 1]} : vector<8x384xf32> to vector<8x128xf32>
    %127 = arith.addf %125, %126 : vector<8x128xf32>
    %128 = arith.negf %127 : vector<8x128xf32>
    %129 = math.exp %128 : vector<8x128xf32>
    %cst_34 = arith.constant 1.000000e+00 : f32
    %130 = vector.broadcast %cst_34 : f32 to vector<8x128xf32>
    %131 = arith.addf %130, %129 : vector<8x128xf32>
    %132 = arith.divf %130, %131 : vector<8x128xf32>
    %133 = vector.extract_strided_slice %115 {offsets = [0, 256], sizes = [8, 128], strides = [1, 1]} : vector<8x384xf32> to vector<8x128xf32>
    %134 = vector.extract_strided_slice %116 {offsets = [0, 256], sizes = [8, 128], strides = [1, 1]} : vector<8x384xf32> to vector<8x128xf32>
    %135 = arith.addf %134, %6 : vector<8x128xf32>
    %136 = arith.mulf %124, %135 : vector<8x128xf32>
    %137 = arith.addf %133, %136 : vector<8x128xf32>
    %138 = math.tanh %137 : vector<8x128xf32>
    %cst_35 = arith.constant 1.000000e+00 : f32
    %139 = vector.broadcast %cst_35 : f32 to vector<8x128xf32>
    %140 = arith.subf %139, %132 : vector<8x128xf32>
    %141 = arith.mulf %140, %138 : vector<8x128xf32>
    %142 = arith.mulf %132, %108 : vector<8x128xf32>
    %143 = arith.addf %141, %142 : vector<8x128xf32>
    %144 = arith.index_cast %c3_i32 : i32 to index
    %c0_36 = arith.constant 0 : index
    %c0_37 = arith.constant 0 : index
    %145 = vector.load %arg5[%144, %c0_36, %c0_37] : memref<8x8x128xf32, #tpu.memory_space<vmem>>, vector<1x8x128xf32>
    %146 = vector.shape_cast %145 : vector<1x8x128xf32> to vector<8x128xf32>
    %147 = vector.shape_cast %143 : vector<8x128xf32> to vector<1x8x128xf32>
    tpu.vector_store %arg5[%144, %c0_36, %c0_37], %147 {strides = array<i32>} : memref<8x8x128xf32, #tpu.memory_space<vmem>>, vector<1x8x128xf32>,
    %c4_i32 = arith.constant 4 : i32
    %148 = arith.index_cast %c4_i32 : i32 to index
    %c0_38 = arith.constant 0 : index
    %c0_39 = arith.constant 0 : index
    %149 = vector.load %arg2[%148, %c0_38, %c0_39] : memref<8x8x384xf32, #tpu.memory_space<vmem>>, vector<1x8x384xf32>
    %150 = vector.shape_cast %149 : vector<1x8x384xf32> to vector<8x384xf32>
    %cst_40 = arith.constant dense<0.000000e+00> : vector<8x384xf32>
    %151 = tpu.matmul %143, %3, %cst_40 {dimension_numbers = #tpu.dot_dimension_numbers<[1], [0], [0], [1], [0, 0, 1, 1], [], []>} : vector<8x128xf32>, vector<128x384xf32>, vector<8x384xf32> -> vector<8x384xf32>
    %152 = vector.extract_strided_slice %150 {offsets = [0, 0], sizes = [8, 128], strides = [1, 1]} : vector<8x384xf32> to vector<8x128xf32>
    %153 = vector.extract_strided_slice %151 {offsets = [0, 0], sizes = [8, 128], strides = [1, 1]} : vector<8x384xf32> to vector<8x128xf32>
    %154 = arith.addf %152, %153 : vector<8x128xf32>
    %155 = arith.negf %154 : vector<8x128xf32>
    %156 = math.exp %155 : vector<8x128xf32>
    %cst_41 = arith.constant 1.000000e+00 : f32
    %157 = vector.broadcast %cst_41 : f32 to vector<8x128xf32>
    %158 = arith.addf %157, %156 : vector<8x128xf32>
    %159 = arith.divf %157, %158 : vector<8x128xf32>
    %160 = vector.extract_strided_slice %150 {offsets = [0, 128], sizes = [8, 128], strides = [1, 1]} : vector<8x384xf32> to vector<8x128xf32>
    %161 = vector.extract_strided_slice %151 {offsets = [0, 128], sizes = [8, 128], strides = [1, 1]} : vector<8x384xf32> to vector<8x128xf32>
    %162 = arith.addf %160, %161 : vector<8x128xf32>
    %163 = arith.negf %162 : vector<8x128xf32>
    %164 = math.exp %163 : vector<8x128xf32>
    %cst_42 = arith.constant 1.000000e+00 : f32
    %165 = vector.broadcast %cst_42 : f32 to vector<8x128xf32>
    %166 = arith.addf %165, %164 : vector<8x128xf32>
    %167 = arith.divf %165, %166 : vector<8x128xf32>
    %168 = vector.extract_strided_slice %150 {offsets = [0, 256], sizes = [8, 128], strides = [1, 1]} : vector<8x384xf32> to vector<8x128xf32>
    %169 = vector.extract_strided_slice %151 {offsets = [0, 256], sizes = [8, 128], strides = [1, 1]} : vector<8x384xf32> to vector<8x128xf32>
    %170 = arith.addf %169, %6 : vector<8x128xf32>
    %171 = arith.mulf %159, %170 : vector<8x128xf32>
    %172 = arith.addf %168, %171 : vector<8x128xf32>
    %173 = math.tanh %172 : vector<8x128xf32>
    %cst_43 = arith.constant 1.000000e+00 : f32
    %174 = vector.broadcast %cst_43 : f32 to vector<8x128xf32>
    %175 = arith.subf %174, %167 : vector<8x128xf32>
    %176 = arith.mulf %175, %173 : vector<8x128xf32>
    %177 = arith.mulf %167, %143 : vector<8x128xf32>
    %178 = arith.addf %176, %177 : vector<8x128xf32>
    %179 = arith.index_cast %c4_i32 : i32 to index
    %c0_44 = arith.constant 0 : index
    %c0_45 = arith.constant 0 : index
    %180 = vector.load %arg5[%179, %c0_44, %c0_45] : memref<8x8x128xf32, #tpu.memory_space<vmem>>, vector<1x8x128xf32>
    %181 = vector.shape_cast %180 : vector<1x8x128xf32> to vector<8x128xf32>
    %182 = vector.shape_cast %178 : vector<8x128xf32> to vector<1x8x128xf32>
    tpu.vector_store %arg5[%179, %c0_44, %c0_45], %182 {strides = array<i32>} : memref<8x8x128xf32, #tpu.memory_space<vmem>>, vector<1x8x128xf32>,
    %c5_i32 = arith.constant 5 : i32
    %183 = arith.index_cast %c5_i32 : i32 to index
    %c0_46 = arith.constant 0 : index
    %c0_47 = arith.constant 0 : index
    %184 = vector.load %arg2[%183, %c0_46, %c0_47] : memref<8x8x384xf32, #tpu.memory_space<vmem>>, vector<1x8x384xf32>
    %185 = vector.shape_cast %184 : vector<1x8x384xf32> to vector<8x384xf32>
    %cst_48 = arith.constant dense<0.000000e+00> : vector<8x384xf32>
    %186 = tpu.matmul %178, %3, %cst_48 {dimension_numbers = #tpu.dot_dimension_numbers<[1], [0], [0], [1], [0, 0, 1, 1], [], []>} : vector<8x128xf32>, vector<128x384xf32>, vector<8x384xf32> -> vector<8x384xf32>
    %187 = vector.extract_strided_slice %185 {offsets = [0, 0], sizes = [8, 128], strides = [1, 1]} : vector<8x384xf32> to vector<8x128xf32>
    %188 = vector.extract_strided_slice %186 {offsets = [0, 0], sizes = [8, 128], strides = [1, 1]} : vector<8x384xf32> to vector<8x128xf32>
    %189 = arith.addf %187, %188 : vector<8x128xf32>
    %190 = arith.negf %189 : vector<8x128xf32>
    %191 = math.exp %190 : vector<8x128xf32>
    %cst_49 = arith.constant 1.000000e+00 : f32
    %192 = vector.broadcast %cst_49 : f32 to vector<8x128xf32>
    %193 = arith.addf %192, %191 : vector<8x128xf32>
    %194 = arith.divf %192, %193 : vector<8x128xf32>
    %195 = vector.extract_strided_slice %185 {offsets = [0, 128], sizes = [8, 128], strides = [1, 1]} : vector<8x384xf32> to vector<8x128xf32>
    %196 = vector.extract_strided_slice %186 {offsets = [0, 128], sizes = [8, 128], strides = [1, 1]} : vector<8x384xf32> to vector<8x128xf32>
    %197 = arith.addf %195, %196 : vector<8x128xf32>
    %198 = arith.negf %197 : vector<8x128xf32>
    %199 = math.exp %198 : vector<8x128xf32>
    %cst_50 = arith.constant 1.000000e+00 : f32
    %200 = vector.broadcast %cst_50 : f32 to vector<8x128xf32>
    %201 = arith.addf %200, %199 : vector<8x128xf32>
    %202 = arith.divf %200, %201 : vector<8x128xf32>
    %203 = vector.extract_strided_slice %185 {offsets = [0, 256], sizes = [8, 128], strides = [1, 1]} : vector<8x384xf32> to vector<8x128xf32>
    %204 = vector.extract_strided_slice %186 {offsets = [0, 256], sizes = [8, 128], strides = [1, 1]} : vector<8x384xf32> to vector<8x128xf32>
    %205 = arith.addf %204, %6 : vector<8x128xf32>
    %206 = arith.mulf %194, %205 : vector<8x128xf32>
    %207 = arith.addf %203, %206 : vector<8x128xf32>
    %208 = math.tanh %207 : vector<8x128xf32>
    %cst_51 = arith.constant 1.000000e+00 : f32
    %209 = vector.broadcast %cst_51 : f32 to vector<8x128xf32>
    %210 = arith.subf %209, %202 : vector<8x128xf32>
    %211 = arith.mulf %210, %208 : vector<8x128xf32>
    %212 = arith.mulf %202, %178 : vector<8x128xf32>
    %213 = arith.addf %211, %212 : vector<8x128xf32>
    %214 = arith.index_cast %c5_i32 : i32 to index
    %c0_52 = arith.constant 0 : index
    %c0_53 = arith.constant 0 : index
    %215 = vector.load %arg5[%214, %c0_52, %c0_53] : memref<8x8x128xf32, #tpu.memory_space<vmem>>, vector<1x8x128xf32>
    %216 = vector.shape_cast %215 : vector<1x8x128xf32> to vector<8x128xf32>
    %217 = vector.shape_cast %213 : vector<8x128xf32> to vector<1x8x128xf32>
    tpu.vector_store %arg5[%214, %c0_52, %c0_53], %217 {strides = array<i32>} : memref<8x8x128xf32, #tpu.memory_space<vmem>>, vector<1x8x128xf32>,
    %c6_i32 = arith.constant 6 : i32
    %218 = arith.index_cast %c6_i32 : i32 to index
    %c0_54 = arith.constant 0 : index
    %c0_55 = arith.constant 0 : index
    %219 = vector.load %arg2[%218, %c0_54, %c0_55] : memref<8x8x384xf32, #tpu.memory_space<vmem>>, vector<1x8x384xf32>
    %220 = vector.shape_cast %219 : vector<1x8x384xf32> to vector<8x384xf32>
    %cst_56 = arith.constant dense<0.000000e+00> : vector<8x384xf32>
    %221 = tpu.matmul %213, %3, %cst_56 {dimension_numbers = #tpu.dot_dimension_numbers<[1], [0], [0], [1], [0, 0, 1, 1], [], []>} : vector<8x128xf32>, vector<128x384xf32>, vector<8x384xf32> -> vector<8x384xf32>
    %222 = vector.extract_strided_slice %220 {offsets = [0, 0], sizes = [8, 128], strides = [1, 1]} : vector<8x384xf32> to vector<8x128xf32>
    %223 = vector.extract_strided_slice %221 {offsets = [0, 0], sizes = [8, 128], strides = [1, 1]} : vector<8x384xf32> to vector<8x128xf32>
    %224 = arith.addf %222, %223 : vector<8x128xf32>
    %225 = arith.negf %224 : vector<8x128xf32>
    %226 = math.exp %225 : vector<8x128xf32>
    %cst_57 = arith.constant 1.000000e+00 : f32
    %227 = vector.broadcast %cst_57 : f32 to vector<8x128xf32>
    %228 = arith.addf %227, %226 : vector<8x128xf32>
    %229 = arith.divf %227, %228 : vector<8x128xf32>
    %230 = vector.extract_strided_slice %220 {offsets = [0, 128], sizes = [8, 128], strides = [1, 1]} : vector<8x384xf32> to vector<8x128xf32>
    %231 = vector.extract_strided_slice %221 {offsets = [0, 128], sizes = [8, 128], strides = [1, 1]} : vector<8x384xf32> to vector<8x128xf32>
    %232 = arith.addf %230, %231 : vector<8x128xf32>
    %233 = arith.negf %232 : vector<8x128xf32>
    %234 = math.exp %233 : vector<8x128xf32>
    %cst_58 = arith.constant 1.000000e+00 : f32
    %235 = vector.broadcast %cst_58 : f32 to vector<8x128xf32>
    %236 = arith.addf %235, %234 : vector<8x128xf32>
    %237 = arith.divf %235, %236 : vector<8x128xf32>
    %238 = vector.extract_strided_slice %220 {offsets = [0, 256], sizes = [8, 128], strides = [1, 1]} : vector<8x384xf32> to vector<8x128xf32>
    %239 = vector.extract_strided_slice %221 {offsets = [0, 256], sizes = [8, 128], strides = [1, 1]} : vector<8x384xf32> to vector<8x128xf32>
    %240 = arith.addf %239, %6 : vector<8x128xf32>
    %241 = arith.mulf %229, %240 : vector<8x128xf32>
    %242 = arith.addf %238, %241 : vector<8x128xf32>
    %243 = math.tanh %242 : vector<8x128xf32>
    %cst_59 = arith.constant 1.000000e+00 : f32
    %244 = vector.broadcast %cst_59 : f32 to vector<8x128xf32>
    %245 = arith.subf %244, %237 : vector<8x128xf32>
    %246 = arith.mulf %245, %243 : vector<8x128xf32>
    %247 = arith.mulf %237, %213 : vector<8x128xf32>
    %248 = arith.addf %246, %247 : vector<8x128xf32>
    %249 = arith.index_cast %c6_i32 : i32 to index
    %c0_60 = arith.constant 0 : index
    %c0_61 = arith.constant 0 : index
    %250 = vector.load %arg5[%249, %c0_60, %c0_61] : memref<8x8x128xf32, #tpu.memory_space<vmem>>, vector<1x8x128xf32>
    %251 = vector.shape_cast %250 : vector<1x8x128xf32> to vector<8x128xf32>
    %252 = vector.shape_cast %248 : vector<8x128xf32> to vector<1x8x128xf32>
    tpu.vector_store %arg5[%249, %c0_60, %c0_61], %252 {strides = array<i32>} : memref<8x8x128xf32, #tpu.memory_space<vmem>>, vector<1x8x128xf32>,
    %c7_i32 = arith.constant 7 : i32
    %253 = arith.index_cast %c7_i32 : i32 to index
    %c0_62 = arith.constant 0 : index
    %c0_63 = arith.constant 0 : index
    %254 = vector.load %arg2[%253, %c0_62, %c0_63] : memref<8x8x384xf32, #tpu.memory_space<vmem>>, vector<1x8x384xf32>
    %255 = vector.shape_cast %254 : vector<1x8x384xf32> to vector<8x384xf32>
    %cst_64 = arith.constant dense<0.000000e+00> : vector<8x384xf32>
    %256 = tpu.matmul %248, %3, %cst_64 {dimension_numbers = #tpu.dot_dimension_numbers<[1], [0], [0], [1], [0, 0, 1, 1], [], []>} : vector<8x128xf32>, vector<128x384xf32>, vector<8x384xf32> -> vector<8x384xf32>
    %257 = vector.extract_strided_slice %255 {offsets = [0, 0], sizes = [8, 128], strides = [1, 1]} : vector<8x384xf32> to vector<8x128xf32>
    %258 = vector.extract_strided_slice %256 {offsets = [0, 0], sizes = [8, 128], strides = [1, 1]} : vector<8x384xf32> to vector<8x128xf32>
    %259 = arith.addf %257, %258 : vector<8x128xf32>
    %260 = arith.negf %259 : vector<8x128xf32>
    %261 = math.exp %260 : vector<8x128xf32>
    %cst_65 = arith.constant 1.000000e+00 : f32
    %262 = vector.broadcast %cst_65 : f32 to vector<8x128xf32>
    %263 = arith.addf %262, %261 : vector<8x128xf32>
    %264 = arith.divf %262, %263 : vector<8x128xf32>
    %265 = vector.extract_strided_slice %255 {offsets = [0, 128], sizes = [8, 128], strides = [1, 1]} : vector<8x384xf32> to vector<8x128xf32>
    %266 = vector.extract_strided_slice %256 {offsets = [0, 128], sizes = [8, 128], strides = [1, 1]} : vector<8x384xf32> to vector<8x128xf32>
    %267 = arith.addf %265, %266 : vector<8x128xf32>
    %268 = arith.negf %267 : vector<8x128xf32>
    %269 = math.exp %268 : vector<8x128xf32>
    %cst_66 = arith.constant 1.000000e+00 : f32
    %270 = vector.broadcast %cst_66 : f32 to vector<8x128xf32>
    %271 = arith.addf %270, %269 : vector<8x128xf32>
    %272 = arith.divf %270, %271 : vector<8x128xf32>
    %273 = vector.extract_strided_slice %255 {offsets = [0, 256], sizes = [8, 128], strides = [1, 1]} : vector<8x384xf32> to vector<8x128xf32>
    %274 = vector.extract_strided_slice %256 {offsets = [0, 256], sizes = [8, 128], strides = [1, 1]} : vector<8x384xf32> to vector<8x128xf32>
    %275 = arith.addf %274, %6 : vector<8x128xf32>
    %276 = arith.mulf %264, %275 : vector<8x128xf32>
    %277 = arith.addf %273, %276 : vector<8x128xf32>
    %278 = math.tanh %277 : vector<8x128xf32>
    %cst_67 = arith.constant 1.000000e+00 : f32
    %279 = vector.broadcast %cst_67 : f32 to vector<8x128xf32>
    %280 = arith.subf %279, %272 : vector<8x128xf32>
    %281 = arith.mulf %280, %278 : vector<8x128xf32>
    %282 = arith.mulf %272, %248 : vector<8x128xf32>
    %283 = arith.addf %281, %282 : vector<8x128xf32>
    %284 = arith.index_cast %c7_i32 : i32 to index
    %c0_68 = arith.constant 0 : index
    %c0_69 = arith.constant 0 : index
    %285 = vector.load %arg5[%284, %c0_68, %c0_69] : memref<8x8x128xf32, #tpu.memory_space<vmem>>, vector<1x8x128xf32>
    %286 = vector.shape_cast %285 : vector<1x8x128xf32> to vector<8x128xf32>
    %287 = vector.shape_cast %283 : vector<8x128xf32> to vector<1x8x128xf32>
    tpu.vector_store %arg5[%284, %c0_68, %c0_69], %287 {strides = array<i32>} : memref<8x8x128xf32, #tpu.memory_space<vmem>>, vector<1x8x128xf32>,
    %c8_i32 = arith.constant 8 : i32
    %c0_70 = arith.constant 0 : index
    %c0_71 = arith.constant 0 : index
    %288 = vector.load %arg6[%c0_70, %c0_71] : memref<8x128xf32, #tpu.memory_space<vmem>>, vector<8x128xf32>
    tpu.vector_store %arg6[%c0_70, %c0_71], %283 {strides = array<i32>} : memref<8x128xf32, #tpu.memory_space<vmem>>, vector<8x128xf32>,
    return
  }
  func.func @transform_0(%arg0: i32, %arg1: i32) -> (i32, i32, i32) {
    %c0_i32 = arith.constant 0 : i32
    %c0_i32_0 = arith.constant 0 : i32
    return %arg1, %arg0, %c0_i32 : i32, i32, i32
  }
  func.func @transform_1(%arg0: i32, %arg1: i32) -> (i32, i32) {
    %c0_i32 = arith.constant 0 : i32
    %c0_i32_0 = arith.constant 0 : i32
    %c0_i32_1 = arith.constant 0 : i32
    return %c0_i32, %c0_i32_0 : i32, i32
  }
  func.func @transform_2(%arg0: i32, %arg1: i32) -> (i32, i32) {
    %c0_i32 = arith.constant 0 : i32
    %c0_i32_0 = arith.constant 0 : i32
    %c0_i32_1 = arith.constant 0 : i32
    return %c0_i32, %c0_i32_0 : i32, i32
  }
  func.func @transform_3(%arg0: i32, %arg1: i32) -> (i32, i32, i32) {
    %c0_i32 = arith.constant 0 : i32
    %c0_i32_0 = arith.constant 0 : i32
    return %arg1, %arg0, %c0_i32 : i32, i32, i32
  }
}

</mosaic_0001>

<llo_original>
// kernel: rnn_layer_forward.1
$region0: #{rnn_layer_forward.1}
  #allocation0 [shape = 'u32[]', space=smem, size = 0x4, offset = 0x4, fixed_abs, tag = 'smem constant byte address 0x4 - core index']
  #allocation1 [shape = 'u32[72,128]{1,0:T(1,128)}', space=vmem, size = 0x9000, scoped, tag = 'internal scratch']
  #allocation2 [shape = 'f32[8,128]{1,0:T(8,128)}', space=vmem, size = 0x1000, scoped, tag = 'scratch operand']
  %s0 = inlined_call_operand.vmem [shape: f32[8,8,384], index: 0, kind: input, shape index: {}]
  %s1 = inlined_call_operand.vmem [shape: f32[128,384], index: 1, kind: input, shape index: {}]
  %s2 = inlined_call_operand.vmem [shape: f32[1,128], index: 2, kind: input, shape index: {}]
  %s3 = inlined_call_operand.vmem [shape: f32[8,8,128], index: 3, kind: output, shape index: {}]
  %s4 = sld [smem:[#allocation0]]
  $region26: #{rnn_layer_forward.1} parent=0
    _
  %s6 = ssub.s32 1, %s4
  %s7 = scalar_select 0, %s6, %s4
  // Predicated region
  $region2: #{rnn_layer_forward.1} parent=0 // pred_check
    _
  $region3: #{rnn_layer_forward.1} parent=0 // pred_check_branch
    %9 = sbr.rel (0) target = $region5
  $region4: #{rnn_layer_forward.1} parent=0 // pred_region
    _
  $region5: #{rnn_layer_forward.1} parent=0 // pred_fallthru
    _
  // Predicated region
  $region6: #{rnn_layer_forward.1} parent=0 // pred_check
    _
  $region7: #{rnn_layer_forward.1} parent=0 // pred_check_branch
    %11 = sbr.rel (0) target = $region9
  $region8: #{rnn_layer_forward.1} parent=0 // pred_region
    _
  $region9: #{rnn_layer_forward.1} parent=0 // pred_fallthru
    _
  // Predicated region
  $region10: #{rnn_layer_forward.1} parent=0 // pred_check
    _
  $region11: #{rnn_layer_forward.1} parent=0 // pred_check_branch
    %13 = sbr.rel (0) target = $region13
  $region12: #{rnn_layer_forward.1} parent=0 // pred_region
    _
  $region13: #{rnn_layer_forward.1} parent=0 // pred_fallthru
    _
  %p14 = scmp.eq.s32.totalorder 0, 0
  // Predicated region
  $region14: #{rnn_layer_forward.1} parent=0 // pred_check
    %p15 = pneg %p14
  $region15: #{rnn_layer_forward.1} parent=0 // pred_check_branch
    %17 = sbr.rel (%p15) target = $region17
  $region16: #{rnn_layer_forward.1} parent=0 // pred_region
    %18 = vst [vmem:[#allocation2] sm:$0xff] 0.0
  $region17: #{rnn_layer_forward.1} parent=0 // pred_fallthru
    _
  %v19 = vld [vmem:[%s1] sm:$0xff]
  %v20 = vld [vmem:[%s1 + $0x8] sm:$0xff]
  %v21 = vld [vmem:[%s1 + $0x10] sm:$0xff]
  %v22 = vld [vmem:[%s1 + $0x18] sm:$0xff]
  %v23 = vld [vmem:[%s1 + $0x20] sm:$0xff]
  %v24 = vld [vmem:[%s1 + $0x28] sm:$0xff]
  %v25 = vld [vmem:[%s1 + $0x30] sm:$0xff]
  %v26 = vld [vmem:[%s1 + $0x38] sm:$0xff]
  %v27 = vld [vmem:[%s1 + $0x40] sm:$0xff]
  %v28 = vld [vmem:[%s1 + $0x48] sm:$0xff]
  %v29 = vld [vmem:[%s1 + $0x50] sm:$0xff]
  %v30 = vld [vmem:[%s1 + $0x58] sm:$0xff]
  %v31 = vld [vmem:[%s1 + $0x60] sm:$0xff]
  %v32 = vld [vmem:[%s1 + $0x68] sm:$0xff]
  %v33 = vld [vmem:[%s1 + $0x70] sm:$0xff]
  %v34 = vld [vmem:[%s1 + $0x78] sm:$0xff]
  %v35 = vld [vmem:[%s1 + $0x80] sm:$0xff]
  %v36 = vld [vmem:[%s1 + $0x88] sm:$0xff]
  %v37 = vld [vmem:[%s1 + $0x90] sm:$0xff]
  %v38 = vld [vmem:[%s1 + $0x98] sm:$0xff]
  %v39 = vld [vmem:[%s1 + $0xa0] sm:$0xff]
  %v40 = vld [vmem:[%s1 + $0xa8] sm:$0xff]
  %v41 = vld [vmem:[%s1 + $0xb0] sm:$0xff]
  %v42 = vld [vmem:[%s1 + $0xb8] sm:$0xff]
  %v43 = vld [vmem:[%s1 + $0xc0] sm:$0xff]
  %v44 = vld [vmem:[%s1 + $0xc8] sm:$0xff]
  %v45 = vld [vmem:[%s1 + $0xd0] sm:$0xff]
  %v46 = vld [vmem:[%s1 + $0xd8] sm:$0xff]
  %v47 = vld [vmem:[%s1 + $0xe0] sm:$0xff]
  %v48 = vld [vmem:[%s1 + $0xe8] sm:$0xff]
  %v49 = vld [vmem:[%s1 + $0xf0] sm:$0xff]
  %v50 = vld [vmem:[%s1 + $0xf8] sm:$0xff]
  %v51 = vld [vmem:[%s1 + $0x100] sm:$0xff]
  %v52 = vld [vmem:[%s1 + $0x108] sm:$0xff]
  %v53 = vld [vmem:[%s1 + $0x110] sm:$0xff]
  %v54 = vld [vmem:[%s1 + $0x118] sm:$0xff]
  %v55 = vld [vmem:[%s1 + $0x120] sm:$0xff]
  %v56 = vld [vmem:[%s1 + $0x128] sm:$0xff]
  %v57 = vld [vmem:[%s1 + $0x130] sm:$0xff]
  %v58 = vld [vmem:[%s1 + $0x138] sm:$0xff]
  %v59 = vld [vmem:[%s1 + $0x140] sm:$0xff]
  %v60 = vld [vmem:[%s1 + $0x148] sm:$0xff]
  %v61 = vld [vmem:[%s1 + $0x150] sm:$0xff]
  %v62 = vld [vmem:[%s1 + $0x158] sm:$0xff]
  %v63 = vld [vmem:[%s1 + $0x160] sm:$0xff]
  %v64 = vld [vmem:[%s1 + $0x168] sm:$0xff]
  %v65 = vld [vmem:[%s1 + $0x170] sm:$0xff]
  %v66 = vld [vmem:[%s1 + $0x178] sm:$0xff]
  %v67 = vld [vmem:[%s2] sm:$0x1]
  %v69 = vperm.slane %v67, 0
  %v71 = vld [vmem:[#allocation2] sm:$0xff]
  %v72 = vld [vmem:[%s0] sm:$0xff]
  %v73 = vld [vmem:[%s0 + $0x8] sm:$0xff]
  %v74 = vld [vmem:[%s0 + $0x10] sm:$0xff]
  %75 = vmatpush.msra.mxu0 %v64
  %76 = vmatpush.msra.mxu0 %v61
  %77 = vmatpush.msra.mxu0 %v58
  %78 = vmatpush.msra.mxu0 %v55
  %79 = vmatpush.msra.mxu0 %v52
  %80 = vmatpush.msra.mxu0 %v49
  %81 = vmatpush.msra.mxu0 %v46
  %82 = vmatpush.msra.mxu0 %v43
  %83 = vmatpush.msra.mxu0 %v40
  %84 = vmatpush.msra.mxu0 %v37
  %85 = vmatpush.msra.mxu0 %v34
  %86 = vmatpush.msra.mxu0 %v31
  %87 = vmatpush.msra.mxu0 %v28
  %88 = vmatpush.msra.mxu0 %v25
  %89 = vmatpush.msra.mxu0 %v22
  %90 = vmatpush.msra.mxu0 %v19
  %91 = vmatmul.f32.gmra.mxu0 %v71
  %v92 = vpop.f32.mrf.mxu0
  %v93 = vadd.f32 0.0, %v92
  %94 = vdwg.mxu0
  %95 = vmatpush.msra.mxu0 %v65
  %96 = vmatpush.msra.mxu0 %v62
  %97 = vmatpush.msra.mxu0 %v59
  %98 = vmatpush.msra.mxu0 %v56
  %99 = vmatpush.msra.mxu0 %v53
  %100 = vmatpush.msra.mxu0 %v50
  %101 = vmatpush.msra.mxu0 %v47
  %102 = vmatpush.msra.mxu0 %v44
  %103 = vmatpush.msra.mxu0 %v41
  %104 = vmatpush.msra.mxu0 %v38
  %105 = vmatpush.msra.mxu0 %v35
  %106 = vmatpush.msra.mxu0 %v32
  %107 = vmatpush.msra.mxu0 %v29
  %108 = vmatpush.msra.mxu0 %v26
  %109 = vmatpush.msra.mxu0 %v23
  %110 = vmatpush.msra.mxu0 %v20
  %111 = vmatmul.f32.gmra.mxu0 %v71
  %v112 = vpop.f32.mrf.mxu0
  %v113 = vadd.f32 0.0, %v112
  %114 = vdwg.mxu0
  %115 = vmatpush.msra.mxu0 %v66
  %116 = vmatpush.msra.mxu0 %v63
  %117 = vmatpush.msra.mxu0 %v60
  %118 = vmatpush.msra.mxu0 %v57
  %119 = vmatpush.msra.mxu0 %v54
  %120 = vmatpush.msra.mxu0 %v51
  %121 = vmatpush.msra.mxu0 %v48
  %122 = vmatpush.msra.mxu0 %v45
  %123 = vmatpush.msra.mxu0 %v42
  %124 = vmatpush.msra.mxu0 %v39
  %125 = vmatpush.msra.mxu0 %v36
  %126 = vmatpush.msra.mxu0 %v33
  %127 = vmatpush.msra.mxu0 %v30
  %128 = vmatpush.msra.mxu0 %v27
  %129 = vmatpush.msra.mxu0 %v24
  %130 = vmatpush.msra.mxu0 %v21
  %131 = vmatmul.f32.gmra.mxu0 %v71
  %v132 = vpop.f32.mrf.mxu0
  %v133 = vadd.f32 0.0, %v132
  %134 = vdwg.mxu0
  %v135 = vadd.f32 %v72, %v93
  %v136 = vxor.u32 %v135, 2147483648
  %v137 = vmul.f32 %v136, 1.442695
  %v138 = vpow.pop %v137
  %v139 = vadd.f32 %v138, 1.0
  %v140 = vrcp.pop %v139
  %v141 = vmul.f32 %v139, %v140
  %v142 = vsub.f32 1.0, %v141
  %v143 = vmul.f32 %v140, %v142
  %v144 = vadd.f32 %v140, %v143
  %vm145 = vweird.f32 %v139
  %vm146 = vweird.f32 %v140
  %vm147 = vmor %vm145, %vm146
  %v148 = vsel %vm147, %v140, %v144
  %v149 = vand.u32 2147483647, %v139
  %vm150 = vcmp.eq.f32.partialorder %v149, 8.507059e+37
  %v151 = vand.u32 %v139, 2147483648
  %v152 = vor.u32 1.1754944e-38, %v151
  %v153 = vsel %vm150, %v152, %v148
  %v154 = vmul.f32 1.0, %v153
  %v155 = vadd.f32 %v73, %v113
  %v156 = vxor.u32 %v155, 2147483648
  %v157 = vmul.f32 %v156, 1.442695
  %v158 = vpow.pop %v157
  %v159 = vadd.f32 %v158, 1.0
  %v160 = vrcp.pop %v159
  %v161 = vmul.f32 %v159, %v160
  %v162 = vsub.f32 1.0, %v161
  %v163 = vmul.f32 %v160, %v162
  %v164 = vadd.f32 %v160, %v163
  %vm165 = vweird.f32 %v159
  %vm166 = vweird.f32 %v160
  %vm167 = vmor %vm165, %vm166
  %v168 = vsel %vm167, %v160, %v164
  %v169 = vand.u32 2147483647, %v159
  %vm170 = vcmp.eq.f32.partialorder %v169, 8.507059e+37
  %v171 = vand.u32 %v159, 2147483648
  %v172 = vor.u32 1.1754944e-38, %v171
  %v173 = vsel %vm170, %v172, %v168
  %v174 = vmul.f32 1.0, %v173
  %v175 = vadd.f32 %v133, %v69
  %v176 = vmul.f32 %v154, %v175
  %v177 = vadd.f32 %v74, %v176
  %v178 = vtanh.pop %v177
  %v179 = vsub.f32 1.0, %v174
  %v180 = vmul.f32 %v179, %v178
  %v181 = vmul.f32 %v174, %v71
  %v182 = vadd.f32 %v180, %v181
  %183 = vst [vmem:[%s3] sm:$0xff] %v182
  %s184 = scalar_lea.vmem %s0, 24
  %v185 = vld [vmem:[%s184] sm:$0xff]
  %v186 = vld [vmem:[%s184 + $0x8] sm:$0xff]
  %v187 = vld [vmem:[%s184 + $0x10] sm:$0xff]
  %188 = vmatpush.msra.mxu0 %v64
  %189 = vmatpush.msra.mxu0 %v61
  %190 = vmatpush.msra.mxu0 %v58
  %191 = vmatpush.msra.mxu0 %v55
  %192 = vmatpush.msra.mxu0 %v52
  %193 = vmatpush.msra.mxu0 %v49
  %194 = vmatpush.msra.mxu0 %v46
  %195 = vmatpush.msra.mxu0 %v43
  %196 = vmatpush.msra.mxu0 %v40
  %197 = vmatpush.msra.mxu0 %v37
  %198 = vmatpush.msra.mxu0 %v34
  %199 = vmatpush.msra.mxu0 %v31
  %200 = vmatpush.msra.mxu0 %v28
  %201 = vmatpush.msra.mxu0 %v25
  %202 = vmatpush.msra.mxu0 %v22
  %203 = vmatpush.msra.mxu0 %v19
  %204 = vmatmul.f32.gmra.mxu0 %v182
  %v205 = vpop.f32.mrf.mxu0
  %v206 = vadd.f32 0.0, %v205
  %207 = vdwg.mxu0
  %208 = vmatpush.msra.mxu0 %v65
  %209 = vmatpush.msra.mxu0 %v62
  %210 = vmatpush.msra.mxu0 %v59
  %211 = vmatpush.msra.mxu0 %v56
  %212 = vmatpush.msra.mxu0 %v53
  %213 = vmatpush.msra.mxu0 %v50
  %214 = vmatpush.msra.mxu0 %v47
  %215 = vmatpush.msra.mxu0 %v44
  %216 = vmatpush.msra.mxu0 %v41
  %217 = vmatpush.msra.mxu0 %v38
  %218 = vmatpush.msra.mxu0 %v35
  %219 = vmatpush.msra.mxu0 %v32
  %220 = vmatpush.msra.mxu0 %v29
  %221 = vmatpush.msra.mxu0 %v26
  %222 = vmatpush.msra.mxu0 %v23
  %223 = vmatpush.msra.mxu0 %v20
  %224 = vmatmul.f32.gmra.mxu0 %v182
  %v225 = vpop.f32.mrf.mxu0
  %v226 = vadd.f32 0.0, %v225
  %227 = vdwg.mxu0
  %228 = vmatpush.msra.mxu0 %v66
  %229 = vmatpush.msra.mxu0 %v63
  %230 = vmatpush.msra.mxu0 %v60
  %231 = vmatpush.msra.mxu0 %v57
  %232 = vmatpush.msra.mxu0 %v54
  %233 = vmatpush.msra.mxu0 %v51
  %234 = vmatpush.msra.mxu0 %v48
  %235 = vmatpush.msra.mxu0 %v45
  %236 = vmatpush.msra.mxu0 %v42
  %237 = vmatpush.msra.mxu0 %v39
  %238 = vmatpush.msra.mxu0 %v36
  %239 = vmatpush.msra.mxu0 %v33
  %240 = vmatpush.msra.mxu0 %v30
  %241 = vmatpush.msra.mxu0 %v27
  %242 = vmatpush.msra.mxu0 %v24
  %243 = vmatpush.msra.mxu0 %v21
  %244 = vmatmul.f32.gmra.mxu0 %v182
  %v245 = vpop.f32.mrf.mxu0
  %v246 = vadd.f32 0.0, %v245
  %247 = vdwg.mxu0
  %v248 = vadd.f32 %v185, %v206
  %v249 = vxor.u32 %v248, 2147483648
  %v250 = vmul.f32 %v249, 1.442695
  %v251 = vpow.pop %v250
  %v252 = vadd.f32 %v251, 1.0
  %v253 = vrcp.pop %v252
  %v254 = vmul.f32 %v252, %v253
  %v255 = vsub.f32 1.0, %v254
  %v256 = vmul.f32 %v253, %v255
  %v257 = vadd.f32 %v253, %v256
  %vm258 = vweird.f32 %v252
  %vm259 = vweird.f32 %v253
  %vm260 = vmor %vm258, %vm259
  %v261 = vsel %vm260, %v253, %v257
  %v262 = vand.u32 2147483647, %v252
  %vm263 = vcmp.eq.f32.partialorder %v262, 8.507059e+37
  %v264 = vand.u32 %v252, 2147483648
  %v265 = vor.u32 1.1754944e-38, %v264
  %v266 = vsel %vm263, %v265, %v261
  %v267 = vmul.f32 1.0, %v266
  %v268 = vadd.f32 %v186, %v226
  %v269 = vxor.u32 %v268, 2147483648
  %v270 = vmul.f32 %v269, 1.442695
  %v271 = vpow.pop %v270
  %v272 = vadd.f32 %v271, 1.0
  %v273 = vrcp.pop %v272
  %v274 = vmul.f32 %v272, %v273
  %v275 = vsub.f32 1.0, %v274
  %v276 = vmul.f32 %v273, %v275
  %v277 = vadd.f32 %v273, %v276
  %vm278 = vweird.f32 %v272
  %vm279 = vweird.f32 %v273
  %vm280 = vmor %vm278, %vm279
  %v281 = vsel %vm280, %v273, %v277
  %v282 = vand.u32 2147483647, %v272
  %vm283 = vcmp.eq.f32.partialorder %v282, 8.507059e+37
  %v284 = vand.u32 %v272, 2147483648
  %v285 = vor.u32 1.1754944e-38, %v284
  %v286 = vsel %vm283, %v285, %v281
  %v287 = vmul.f32 1.0, %v286
  %v288 = vadd.f32 %v246, %v69
  %v289 = vmul.f32 %v267, %v288
  %v290 = vadd.f32 %v187, %v289
  %v291 = vtanh.pop %v290
  %v292 = vsub.f32 1.0, %v287
  %v293 = vmul.f32 %v292, %v291
  %v294 = vmul.f32 %v287, %v182
  %v295 = vadd.f32 %v293, %v294
  %s296 = scalar_lea.vmem %s3, 8
  %297 = vst [vmem:[%s296] sm:$0xff] %v295
  %s298 = scalar_lea.vmem %s0, 48
  %v299 = vld [vmem:[%s298] sm:$0xff]
  %v300 = vld [vmem:[%s298 + $0x8] sm:$0xff]
  %v301 = vld [vmem:[%s298 + $0x10] sm:$0xff]
  %302 = vmatpush.msra.mxu0 %v64
  %303 = vmatpush.msra.mxu0 %v61
  %304 = vmatpush.msra.mxu0 %v58
  %305 = vmatpush.msra.mxu0 %v55
  %306 = vmatpush.msra.mxu0 %v52
  %307 = vmatpush.msra.mxu0 %v49
  %308 = vmatpush.msra.mxu0 %v46
  %309 = vmatpush.msra.mxu0 %v43
  %310 = vmatpush.msra.mxu0 %v40
  %311 = vmatpush.msra.mxu0 %v37
  %312 = vmatpush.msra.mxu0 %v34
  %313 = vmatpush.msra.mxu0 %v31
  %314 = vmatpush.msra.mxu0 %v28
  %315 = vmatpush.msra.mxu0 %v25
  %316 = vmatpush.msra.mxu0 %v22
  %317 = vmatpush.msra.mxu0 %v19
  %318 = vmatmul.f32.gmra.mxu0 %v295
  %v319 = vpop.f32.mrf.mxu0
  %v320 = vadd.f32 0.0, %v319
  %321 = vdwg.mxu0
  %322 = vmatpush.msra.mxu0 %v65
  %323 = vmatpush.msra.mxu0 %v62
  %324 = vmatpush.msra.mxu0 %v59
  %325 = vmatpush.msra.mxu0 %v56
  %326 = vmatpush.msra.mxu0 %v53
  %327 = vmatpush.msra.mxu0 %v50
  %328 = vmatpush.msra.mxu0 %v47
  %329 = vmatpush.msra.mxu0 %v44
  %330 = vmatpush.msra.mxu0 %v41
  %331 = vmatpush.msra.mxu0 %v38
  %332 = vmatpush.msra.mxu0 %v35
  %333 = vmatpush.msra.mxu0 %v32
  %334 = vmatpush.msra.mxu0 %v29
  %335 = vmatpush.msra.mxu0 %v26
  %336 = vmatpush.msra.mxu0 %v23
  %337 = vmatpush.msra.mxu0 %v20
  %338 = vmatmul.f32.gmra.mxu0 %v295
  %v339 = vpop.f32.mrf.mxu0
  %v340 = vadd.f32 0.0, %v339
  %341 = vdwg.mxu0
  %342 = vmatpush.msra.mxu0 %v66
  %343 = vmatpush.msra.mxu0 %v63
  %344 = vmatpush.msra.mxu0 %v60
  %345 = vmatpush.msra.mxu0 %v57
  %346 = vmatpush.msra.mxu0 %v54
  %347 = vmatpush.msra.mxu0 %v51
  %348 = vmatpush.msra.mxu0 %v48
  %349 = vmatpush.msra.mxu0 %v45
  %350 = vmatpush.msra.mxu0 %v42
  %351 = vmatpush.msra.mxu0 %v39
  %352 = vmatpush.msra.mxu0 %v36
  %353 = vmatpush.msra.mxu0 %v33
  %354 = vmatpush.msra.mxu0 %v30
  %355 = vmatpush.msra.mxu0 %v27
  %356 = vmatpush.msra.mxu0 %v24
  %357 = vmatpush.msra.mxu0 %v21
  %358 = vmatmul.f32.gmra.mxu0 %v295
  %v359 = vpop.f32.mrf.mxu0
  %v360 = vadd.f32 0.0, %v359
  %361 = vdwg.mxu0
  %v362 = vadd.f32 %v299, %v320
  %v363 = vxor.u32 %v362, 2147483648
  %v364 = vmul.f32 %v363, 1.442695
  %v365 = vpow.pop %v364
  %v366 = vadd.f32 %v365, 1.0
  %v367 = vrcp.pop %v366
  %v368 = vmul.f32 %v366, %v367
  %v369 = vsub.f32 1.0, %v368
  %v370 = vmul.f32 %v367, %v369
  %v371 = vadd.f32 %v367, %v370
  %vm372 = vweird.f32 %v366
  %vm373 = vweird.f32 %v367
  %vm374 = vmor %vm372, %vm373
  %v375 = vsel %vm374, %v367, %v371
  %v376 = vand.u32 2147483647, %v366
  %vm377 = vcmp.eq.f32.partialorder %v376, 8.507059e+37
  %v378 = vand.u32 %v366, 2147483648
  %v379 = vor.u32 1.1754944e-38, %v378
  %v380 = vsel %vm377, %v379, %v375
  %v381 = vmul.f32 1.0, %v380
  %v382 = vadd.f32 %v300, %v340
  %v383 = vxor.u32 %v382, 2147483648
  %v384 = vmul.f32 %v383, 1.442695
  %v385 = vpow.pop %v384
  %v386 = vadd.f32 %v385, 1.0
  %v387 = vrcp.pop %v386
  %v388 = vmul.f32 %v386, %v387
  %v389 = vsub.f32 1.0, %v388
  %v390 = vmul.f32 %v387, %v389
  %v391 = vadd.f32 %v387, %v390
  %vm392 = vweird.f32 %v386
  %vm393 = vweird.f32 %v387
  %vm394 = vmor %vm392, %vm393
  %v395 = vsel %vm394, %v387, %v391
  %v396 = vand.u32 2147483647, %v386
  %vm397 = vcmp.eq.f32.partialorder %v396, 8.507059e+37
  %v398 = vand.u32 %v386, 2147483648
  %v399 = vor.u32 1.1754944e-38, %v398
  %v400 = vsel %vm397, %v399, %v395
  %v401 = vmul.f32 1.0, %v400
  %v402 = vadd.f32 %v360, %v69
  %v403 = vmul.f32 %v381, %v402
  %v404 = vadd.f32 %v301, %v403
  %v405 = vtanh.pop %v404
  %v406 = vsub.f32 1.0, %v401
  %v407 = vmul.f32 %v406, %v405
  %v408 = vmul.f32 %v401, %v295
  %v409 = vadd.f32 %v407, %v408
  %s410 = scalar_lea.vmem %s3, 16
  %411 = vst [vmem:[%s410] sm:$0xff] %v409
  %s412 = scalar_lea.vmem %s0, 72
  %v413 = vld [vmem:[%s412] sm:$0xff]
  %v414 = vld [vmem:[%s412 + $0x8] sm:$0xff]
  %v415 = vld [vmem:[%s412 + $0x10] sm:$0xff]
  %416 = vmatpush.msra.mxu0 %v64
  %417 = vmatpush.msra.mxu0 %v61
  %418 = vmatpush.msra.mxu0 %v58
  %419 = vmatpush.msra.mxu0 %v55
  %420 = vmatpush.msra.mxu0 %v52
  %421 = vmatpush.msra.mxu0 %v49
  %422 = vmatpush.msra.mxu0 %v46
  %423 = vmatpush.msra.mxu0 %v43
  %424 = vmatpush.msra.mxu0 %v40
  %425 = vmatpush.msra.mxu0 %v37
  %426 = vmatpush.msra.mxu0 %v34
  %427 = vmatpush.msra.mxu0 %v31
  %428 = vmatpush.msra.mxu0 %v28
  %429 = vmatpush.msra.mxu0 %v25
  %430 = vmatpush.msra.mxu0 %v22
  %431 = vmatpush.msra.mxu0 %v19
  %432 = vmatmul.f32.gmra.mxu0 %v409
  %v433 = vpop.f32.mrf.mxu0
  %v434 = vadd.f32 0.0, %v433
  %435 = vdwg.mxu0
  %436 = vmatpush.msra.mxu0 %v65
  %437 = vmatpush.msra.mxu0 %v62
  %438 = vmatpush.msra.mxu0 %v59
  %439 = vmatpush.msra.mxu0 %v56
  %440 = vmatpush.msra.mxu0 %v53
  %441 = vmatpush.msra.mxu0 %v50
  %442 = vmatpush.msra.mxu0 %v47
  %443 = vmatpush.msra.mxu0 %v44
  %444 = vmatpush.msra.mxu0 %v41
  %445 = vmatpush.msra.mxu0 %v38
  %446 = vmatpush.msra.mxu0 %v35
  %447 = vmatpush.msra.mxu0 %v32
  %448 = vmatpush.msra.mxu0 %v29
  %449 = vmatpush.msra.mxu0 %v26
  %450 = vmatpush.msra.mxu0 %v23
  %451 = vmatpush.msra.mxu0 %v20
  %452 = vmatmul.f32.gmra.mxu0 %v409
  %v453 = vpop.f32.mrf.mxu0
  %v454 = vadd.f32 0.0, %v453
  %455 = vdwg.mxu0
  %456 = vmatpush.msra.mxu0 %v66
  %457 = vmatpush.msra.mxu0 %v63
  %458 = vmatpush.msra.mxu0 %v60
  %459 = vmatpush.msra.mxu0 %v57
  %460 = vmatpush.msra.mxu0 %v54
  %461 = vmatpush.msra.mxu0 %v51
  %462 = vmatpush.msra.mxu0 %v48
  %463 = vmatpush.msra.mxu0 %v45
  %464 = vmatpush.msra.mxu0 %v42
  %465 = vmatpush.msra.mxu0 %v39
  %466 = vmatpush.msra.mxu0 %v36
  %467 = vmatpush.msra.mxu0 %v33
  %468 = vmatpush.msra.mxu0 %v30
  %469 = vmatpush.msra.mxu0 %v27
  %470 = vmatpush.msra.mxu0 %v24
  %471 = vmatpush.msra.mxu0 %v21
  %472 = vmatmul.f32.gmra.mxu0 %v409
  %v473 = vpop.f32.mrf.mxu0
  %v474 = vadd.f32 0.0, %v473
  %475 = vdwg.mxu0
  %v476 = vadd.f32 %v413, %v434
  %v477 = vxor.u32 %v476, 2147483648
  %v478 = vmul.f32 %v477, 1.442695
  %v479 = vpow.pop %v478
  %v480 = vadd.f32 %v479, 1.0
  %v481 = vrcp.pop %v480
  %v482 = vmul.f32 %v480, %v481
  %v483 = vsub.f32 1.0, %v482
  %v484 = vmul.f32 %v481, %v483
  %v485 = vadd.f32 %v481, %v484
  %vm486 = vweird.f32 %v480
  %vm487 = vweird.f32 %v481
  %vm488 = vmor %vm486, %vm487
  %v489 = vsel %vm488, %v481, %v485
  %v490 = vand.u32 2147483647, %v480
  %vm491 = vcmp.eq.f32.partialorder %v490, 8.507059e+37
  %v492 = vand.u32 %v480, 2147483648
  %v493 = vor.u32 1.1754944e-38, %v492
  %v494 = vsel %vm491, %v493, %v489
  %v495 = vmul.f32 1.0, %v494
  %v496 = vadd.f32 %v414, %v454
  %v497 = vxor.u32 %v496, 2147483648
  %v498 = vmul.f32 %v497, 1.442695
  %v499 = vpow.pop %v498
  %v500 = vadd.f32 %v499, 1.0
  %v501 = vrcp.pop %v500
  %v502 = vmul.f32 %v500, %v501
  %v503 = vsub.f32 1.0, %v502
  %v504 = vmul.f32 %v501, %v503
  %v505 = vadd.f32 %v501, %v504
  %vm506 = vweird.f32 %v500
  %vm507 = vweird.f32 %v501
  %vm508 = vmor %vm506, %vm507
  %v509 = vsel %vm508, %v501, %v505
  %v510 = vand.u32 2147483647, %v500
  %vm511 = vcmp.eq.f32.partialorder %v510, 8.507059e+37
  %v512 = vand.u32 %v500, 2147483648
  %v513 = vor.u32 1.1754944e-38, %v512
  %v514 = vsel %vm511, %v513, %v509
  %v515 = vmul.f32 1.0, %v514
  %v516 = vadd.f32 %v474, %v69
  %v517 = vmul.f32 %v495, %v516
  %v518 = vadd.f32 %v415, %v517
  %v519 = vtanh.pop %v518
  %v520 = vsub.f32 1.0, %v515
  %v521 = vmul.f32 %v520, %v519
  %v522 = vmul.f32 %v515, %v409
  %v523 = vadd.f32 %v521, %v522
  %s524 = scalar_lea.vmem %s3, 24
  %525 = vst [vmem:[%s524] sm:$0xff] %v523
  %s526 = scalar_lea.vmem %s0, 96
  %v527 = vld [vmem:[%s526] sm:$0xff]
  %v528 = vld [vmem:[%s526 + $0x8] sm:$0xff]
  %v529 = vld [vmem:[%s526 + $0x10] sm:$0xff]
  %530 = vmatpush.msra.mxu0 %v64
  %531 = vmatpush.msra.mxu0 %v61
  %532 = vmatpush.msra.mxu0 %v58
  %533 = vmatpush.msra.mxu0 %v55
  %534 = vmatpush.msra.mxu0 %v52
  %535 = vmatpush.msra.mxu0 %v49
  %536 = vmatpush.msra.mxu0 %v46
  %537 = vmatpush.msra.mxu0 %v43
  %538 = vmatpush.msra.mxu0 %v40
  %539 = vmatpush.msra.mxu0 %v37
  %540 = vmatpush.msra.mxu0 %v34
  %541 = vmatpush.msra.mxu0 %v31
  %542 = vmatpush.msra.mxu0 %v28
  %543 = vmatpush.msra.mxu0 %v25
  %544 = vmatpush.msra.mxu0 %v22
  %545 = vmatpush.msra.mxu0 %v19
  %546 = vmatmul.f32.gmra.mxu0 %v523
  %v547 = vpop.f32.mrf.mxu0
  %v548 = vadd.f32 0.0, %v547
  %549 = vdwg.mxu0
  %550 = vmatpush.msra.mxu0 %v65
  %551 = vmatpush.msra.mxu0 %v62
  %552 = vmatpush.msra.mxu0 %v59
  %553 = vmatpush.msra.mxu0 %v56
  %554 = vmatpush.msra.mxu0 %v53
  %555 = vmatpush.msra.mxu0 %v50
  %556 = vmatpush.msra.mxu0 %v47
  %557 = vmatpush.msra.mxu0 %v44
  %558 = vmatpush.msra.mxu0 %v41
  %559 = vmatpush.msra.mxu0 %v38
  %560 = vmatpush.msra.mxu0 %v35
  %561 = vmatpush.msra.mxu0 %v32
  %562 = vmatpush.msra.mxu0 %v29
  %563 = vmatpush.msra.mxu0 %v26
  %564 = vmatpush.msra.mxu0 %v23
  %565 = vmatpush.msra.mxu0 %v20
  %566 = vmatmul.f32.gmra.mxu0 %v523
  %v567 = vpop.f32.mrf.mxu0
  %v568 = vadd.f32 0.0, %v567
  %569 = vdwg.mxu0
  %570 = vmatpush.msra.mxu0 %v66
  %571 = vmatpush.msra.mxu0 %v63
  %572 = vmatpush.msra.mxu0 %v60
  %573 = vmatpush.msra.mxu0 %v57
  %574 = vmatpush.msra.mxu0 %v54
  %575 = vmatpush.msra.mxu0 %v51
  %576 = vmatpush.msra.mxu0 %v48
  %577 = vmatpush.msra.mxu0 %v45
  %578 = vmatpush.msra.mxu0 %v42
  %579 = vmatpush.msra.mxu0 %v39
  %580 = vmatpush.msra.mxu0 %v36
  %581 = vmatpush.msra.mxu0 %v33
  %582 = vmatpush.msra.mxu0 %v30
  %583 = vmatpush.msra.mxu0 %v27
  %584 = vmatpush.msra.mxu0 %v24
  %585 = vmatpush.msra.mxu0 %v21
  %586 = vmatmul.f32.gmra.mxu0 %v523
  %v587 = vpop.f32.mrf.mxu0
  %v588 = vadd.f32 0.0, %v587
  %589 = vdwg.mxu0
  %v590 = vadd.f32 %v527, %v548
  %v591 = vxor.u32 %v590, 2147483648
  %v592 = vmul.f32 %v591, 1.442695
  %v593 = vpow.pop %v592
  %v594 = vadd.f32 %v593, 1.0
  %v595 = vrcp.pop %v594
  %v596 = vmul.f32 %v594, %v595
  %v597 = vsub.f32 1.0, %v596
  %v598 = vmul.f32 %v595, %v597
  %v599 = vadd.f32 %v595, %v598
  %vm600 = vweird.f32 %v594
  %vm601 = vweird.f32 %v595
  %vm602 = vmor %vm600, %vm601
  %v603 = vsel %vm602, %v595, %v599
  %v604 = vand.u32 2147483647, %v594
  %vm605 = vcmp.eq.f32.partialorder %v604, 8.507059e+37
  %v606 = vand.u32 %v594, 2147483648
  %v607 = vor.u32 1.1754944e-38, %v606
  %v608 = vsel %vm605, %v607, %v603
  %v609 = vmul.f32 1.0, %v608
  %v610 = vadd.f32 %v528, %v568
  %v611 = vxor.u32 %v610, 2147483648
  %v612 = vmul.f32 %v611, 1.442695
  %v613 = vpow.pop %v612
  %v614 = vadd.f32 %v613, 1.0
  %v615 = vrcp.pop %v614
  %v616 = vmul.f32 %v614, %v615
  %v617 = vsub.f32 1.0, %v616
  %v618 = vmul.f32 %v615, %v617
  %v619 = vadd.f32 %v615, %v618
  %vm620 = vweird.f32 %v614
  %vm621 = vweird.f32 %v615
  %vm622 = vmor %vm620, %vm621
  %v623 = vsel %vm622, %v615, %v619
  %v624 = vand.u32 2147483647, %v614
  %vm625 = vcmp.eq.f32.partialorder %v624, 8.507059e+37
  %v626 = vand.u32 %v614, 2147483648
  %v627 = vor.u32 1.1754944e-38, %v626
  %v628 = vsel %vm625, %v627, %v623
  %v629 = vmul.f32 1.0, %v628
  %v630 = vadd.f32 %v588, %v69
  %v631 = vmul.f32 %v609, %v630
  %v632 = vadd.f32 %v529, %v631
  %v633 = vtanh.pop %v632
  %v634 = vsub.f32 1.0, %v629
  %v635 = vmul.f32 %v634, %v633
  %v636 = vmul.f32 %v629, %v523
  %v637 = vadd.f32 %v635, %v636
  %s638 = scalar_lea.vmem %s3, 32
  %639 = vst [vmem:[%s638] sm:$0xff] %v637
  %s640 = scalar_lea.vmem %s0, 120
  %v641 = vld [vmem:[%s640] sm:$0xff]
  %v642 = vld [vmem:[%s640 + $0x8] sm:$0xff]
  %v643 = vld [vmem:[%s640 + $0x10] sm:$0xff]
  %644 = vmatpush.msra.mxu0 %v64
  %645 = vmatpush.msra.mxu0 %v61
  %646 = vmatpush.msra.mxu0 %v58
  %647 = vmatpush.msra.mxu0 %v55
  %648 = vmatpush.msra.mxu0 %v52
  %649 = vmatpush.msra.mxu0 %v49
  %650 = vmatpush.msra.mxu0 %v46
  %651 = vmatpush.msra.mxu0 %v43
  %652 = vmatpush.msra.mxu0 %v40
  %653 = vmatpush.msra.mxu0 %v37
  %654 = vmatpush.msra.mxu0 %v34
  %655 = vmatpush.msra.mxu0 %v31
  %656 = vmatpush.msra.mxu0 %v28
  %657 = vmatpush.msra.mxu0 %v25
  %658 = vmatpush.msra.mxu0 %v22
  %659 = vmatpush.msra.mxu0 %v19
  %660 = vmatmul.f32.gmra.mxu0 %v637
  %v661 = vpop.f32.mrf.mxu0
  %v662 = vadd.f32 0.0, %v661
  %663 = vdwg.mxu0
  %664 = vmatpush.msra.mxu0 %v65
  %665 = vmatpush.msra.mxu0 %v62
  %666 = vmatpush.msra.mxu0 %v59
  %667 = vmatpush.msra.mxu0 %v56
  %668 = vmatpush.msra.mxu0 %v53
  %669 = vmatpush.msra.mxu0 %v50
  %670 = vmatpush.msra.mxu0 %v47
  %671 = vmatpush.msra.mxu0 %v44
  %672 = vmatpush.msra.mxu0 %v41
  %673 = vmatpush.msra.mxu0 %v38
  %674 = vmatpush.msra.mxu0 %v35
  %675 = vmatpush.msra.mxu0 %v32
  %676 = vmatpush.msra.mxu0 %v29
  %677 = vmatpush.msra.mxu0 %v26
  %678 = vmatpush.msra.mxu0 %v23
  %679 = vmatpush.msra.mxu0 %v20
  %680 = vmatmul.f32.gmra.mxu0 %v637
  %v681 = vpop.f32.mrf.mxu0
  %v682 = vadd.f32 0.0, %v681
  %683 = vdwg.mxu0
  %684 = vmatpush.msra.mxu0 %v66
  %685 = vmatpush.msra.mxu0 %v63
  %686 = vmatpush.msra.mxu0 %v60
  %687 = vmatpush.msra.mxu0 %v57
  %688 = vmatpush.msra.mxu0 %v54
  %689 = vmatpush.msra.mxu0 %v51
  %690 = vmatpush.msra.mxu0 %v48
  %691 = vmatpush.msra.mxu0 %v45
  %692 = vmatpush.msra.mxu0 %v42
  %693 = vmatpush.msra.mxu0 %v39
  %694 = vmatpush.msra.mxu0 %v36
  %695 = vmatpush.msra.mxu0 %v33
  %696 = vmatpush.msra.mxu0 %v30
  %697 = vmatpush.msra.mxu0 %v27
  %698 = vmatpush.msra.mxu0 %v24
  %699 = vmatpush.msra.mxu0 %v21
  %700 = vmatmul.f32.gmra.mxu0 %v637
  %v701 = vpop.f32.mrf.mxu0
  %v702 = vadd.f32 0.0, %v701
  %703 = vdwg.mxu0
  %v704 = vadd.f32 %v641, %v662
  %v705 = vxor.u32 %v704, 2147483648
  %v706 = vmul.f32 %v705, 1.442695
  %v707 = vpow.pop %v706
  %v708 = vadd.f32 %v707, 1.0
  %v709 = vrcp.pop %v708
  %v710 = vmul.f32 %v708, %v709
  %v711 = vsub.f32 1.0, %v710
  %v712 = vmul.f32 %v709, %v711
  %v713 = vadd.f32 %v709, %v712
  %vm714 = vweird.f32 %v708
  %vm715 = vweird.f32 %v709
  %vm716 = vmor %vm714, %vm715
  %v717 = vsel %vm716, %v709, %v713
  %v718 = vand.u32 2147483647, %v708
  %vm719 = vcmp.eq.f32.partialorder %v718, 8.507059e+37
  %v720 = vand.u32 %v708, 2147483648
  %v721 = vor.u32 1.1754944e-38, %v720
  %v722 = vsel %vm719, %v721, %v717
  %v723 = vmul.f32 1.0, %v722
  %v724 = vadd.f32 %v642, %v682
  %v725 = vxor.u32 %v724, 2147483648
  %v726 = vmul.f32 %v725, 1.442695
  %v727 = vpow.pop %v726
  %v728 = vadd.f32 %v727, 1.0
  %v729 = vrcp.pop %v728
  %v730 = vmul.f32 %v728, %v729
  %v731 = vsub.f32 1.0, %v730
  %v732 = vmul.f32 %v729, %v731
  %v733 = vadd.f32 %v729, %v732
  %vm734 = vweird.f32 %v728
  %vm735 = vweird.f32 %v729
  %vm736 = vmor %vm734, %vm735
  %v737 = vsel %vm736, %v729, %v733
  %v738 = vand.u32 2147483647, %v728
  %vm739 = vcmp.eq.f32.partialorder %v738, 8.507059e+37
  %v740 = vand.u32 %v728, 2147483648
  %v741 = vor.u32 1.1754944e-38, %v740
  %v742 = vsel %vm739, %v741, %v737
  %v743 = vmul.f32 1.0, %v742
  %v744 = vadd.f32 %v702, %v69
  %v745 = vmul.f32 %v723, %v744
  %v746 = vadd.f32 %v643, %v745
  %v747 = vtanh.pop %v746
  %v748 = vsub.f32 1.0, %v743
  %v749 = vmul.f32 %v748, %v747
  %v750 = vmul.f32 %v743, %v637
  %v751 = vadd.f32 %v749, %v750
  %s752 = scalar_lea.vmem %s3, 40
  %753 = vst [vmem:[%s752] sm:$0xff] %v751
  %s754 = scalar_lea.vmem %s0, 144
  %v755 = vld [vmem:[%s754] sm:$0xff]
  %v756 = vld [vmem:[%s754 + $0x8] sm:$0xff]
  %v757 = vld [vmem:[%s754 + $0x10] sm:$0xff]
  %758 = vmatpush.msra.mxu0 %v64
  %759 = vmatpush.msra.mxu0 %v61
  %760 = vmatpush.msra.mxu0 %v58
  %761 = vmatpush.msra.mxu0 %v55
  %762 = vmatpush.msra.mxu0 %v52
  %763 = vmatpush.msra.mxu0 %v49
  %764 = vmatpush.msra.mxu0 %v46
  %765 = vmatpush.msra.mxu0 %v43
  %766 = vmatpush.msra.mxu0 %v40
  %767 = vmatpush.msra.mxu0 %v37
  %768 = vmatpush.msra.mxu0 %v34
  %769 = vmatpush.msra.mxu0 %v31
  %770 = vmatpush.msra.mxu0 %v28
  %771 = vmatpush.msra.mxu0 %v25
  %772 = vmatpush.msra.mxu0 %v22
  %773 = vmatpush.msra.mxu0 %v19
  %774 = vmatmul.f32.gmra.mxu0 %v751
  %v775 = vpop.f32.mrf.mxu0
  %v776 = vadd.f32 0.0, %v775
  %777 = vdwg.mxu0
  %778 = vmatpush.msra.mxu0 %v65
  %779 = vmatpush.msra.mxu0 %v62
  %780 = vmatpush.msra.mxu0 %v59
  %781 = vmatpush.msra.mxu0 %v56
  %782 = vmatpush.msra.mxu0 %v53
  %783 = vmatpush.msra.mxu0 %v50
  %784 = vmatpush.msra.mxu0 %v47
  %785 = vmatpush.msra.mxu0 %v44
  %786 = vmatpush.msra.mxu0 %v41
  %787 = vmatpush.msra.mxu0 %v38
  %788 = vmatpush.msra.mxu0 %v35
  %789 = vmatpush.msra.mxu0 %v32
  %790 = vmatpush.msra.mxu0 %v29
  %791 = vmatpush.msra.mxu0 %v26
  %792 = vmatpush.msra.mxu0 %v23
  %793 = vmatpush.msra.mxu0 %v20
  %794 = vmatmul.f32.gmra.mxu0 %v751
  %v795 = vpop.f32.mrf.mxu0
  %v796 = vadd.f32 0.0, %v795
  %797 = vdwg.mxu0
  %798 = vmatpush.msra.mxu0 %v66
  %799 = vmatpush.msra.mxu0 %v63
  %800 = vmatpush.msra.mxu0 %v60
  %801 = vmatpush.msra.mxu0 %v57
  %802 = vmatpush.msra.mxu0 %v54
  %803 = vmatpush.msra.mxu0 %v51
  %804 = vmatpush.msra.mxu0 %v48
  %805 = vmatpush.msra.mxu0 %v45
  %806 = vmatpush.msra.mxu0 %v42
  %807 = vmatpush.msra.mxu0 %v39
  %808 = vmatpush.msra.mxu0 %v36
  %809 = vmatpush.msra.mxu0 %v33
  %810 = vmatpush.msra.mxu0 %v30
  %811 = vmatpush.msra.mxu0 %v27
  %812 = vmatpush.msra.mxu0 %v24
  %813 = vmatpush.msra.mxu0 %v21
  %814 = vmatmul.f32.gmra.mxu0 %v751
  %v815 = vpop.f32.mrf.mxu0
  %v816 = vadd.f32 0.0, %v815
  %817 = vdwg.mxu0
  %v818 = vadd.f32 %v755, %v776
  %v819 = vxor.u32 %v818, 2147483648
  %v820 = vmul.f32 %v819, 1.442695
  %v821 = vpow.pop %v820
  %v822 = vadd.f32 %v821, 1.0
  %v823 = vrcp.pop %v822
  %v824 = vmul.f32 %v822, %v823
  %v825 = vsub.f32 1.0, %v824
  %v826 = vmul.f32 %v823, %v825
  %v827 = vadd.f32 %v823, %v826
  %vm828 = vweird.f32 %v822
  %vm829 = vweird.f32 %v823
  %vm830 = vmor %vm828, %vm829
  %v831 = vsel %vm830, %v823, %v827
  %v832 = vand.u32 2147483647, %v822
  %vm833 = vcmp.eq.f32.partialorder %v832, 8.507059e+37
  %v834 = vand.u32 %v822, 2147483648
  %v835 = vor.u32 1.1754944e-38, %v834
  %v836 = vsel %vm833, %v835, %v831
  %v837 = vmul.f32 1.0, %v836
  %v838 = vadd.f32 %v756, %v796
  %v839 = vxor.u32 %v838, 2147483648
  %v840 = vmul.f32 %v839, 1.442695
  %v841 = vpow.pop %v840
  %v842 = vadd.f32 %v841, 1.0
  %v843 = vrcp.pop %v842
  %v844 = vmul.f32 %v842, %v843
  %v845 = vsub.f32 1.0, %v844
  %v846 = vmul.f32 %v843, %v845
  %v847 = vadd.f32 %v843, %v846
  %vm848 = vweird.f32 %v842
  %vm849 = vweird.f32 %v843
  %vm850 = vmor %vm848, %vm849
  %v851 = vsel %vm850, %v843, %v847
  %v852 = vand.u32 2147483647, %v842
  %vm853 = vcmp.eq.f32.partialorder %v852, 8.507059e+37
  %v854 = vand.u32 %v842, 2147483648
  %v855 = vor.u32 1.1754944e-38, %v854
  %v856 = vsel %vm853, %v855, %v851
  %v857 = vmul.f32 1.0, %v856
  %v858 = vadd.f32 %v816, %v69
  %v859 = vmul.f32 %v837, %v858
  %v860 = vadd.f32 %v757, %v859
  %v861 = vtanh.pop %v860
  %v862 = vsub.f32 1.0, %v857
  %v863 = vmul.f32 %v862, %v861
  %v864 = vmul.f32 %v857, %v751
  %v865 = vadd.f32 %v863, %v864
  %s866 = scalar_lea.vmem %s3, 48
  %867 = vst [vmem:[%s866] sm:$0xff] %v865
  %s868 = scalar_lea.vmem %s0, 168
  %v869 = vld [vmem:[%s868] sm:$0xff]
  %v870 = vld [vmem:[%s868 + $0x8] sm:$0xff]
  %v871 = vld [vmem:[%s868 + $0x10] sm:$0xff]
  %872 = vmatpush.msra.mxu0 %v64
  %873 = vmatpush.msra.mxu0 %v61
  %874 = vmatpush.msra.mxu0 %v58
  %875 = vmatpush.msra.mxu0 %v55
  %876 = vmatpush.msra.mxu0 %v52
  %877 = vmatpush.msra.mxu0 %v49
  %878 = vmatpush.msra.mxu0 %v46
  %879 = vmatpush.msra.mxu0 %v43
  %880 = vmatpush.msra.mxu0 %v40
  %881 = vmatpush.msra.mxu0 %v37
  %882 = vmatpush.msra.mxu0 %v34
  %883 = vmatpush.msra.mxu0 %v31
  %884 = vmatpush.msra.mxu0 %v28
  %885 = vmatpush.msra.mxu0 %v25
  %886 = vmatpush.msra.mxu0 %v22
  %887 = vmatpush.msra.mxu0 %v19
  %888 = vmatmul.f32.gmra.mxu0 %v865
  %v889 = vpop.f32.mrf.mxu0
  %v890 = vadd.f32 0.0, %v889
  %891 = vdwg.mxu0
  %892 = vmatpush.msra.mxu0 %v65
  %893 = vmatpush.msra.mxu0 %v62
  %894 = vmatpush.msra.mxu0 %v59
  %895 = vmatpush.msra.mxu0 %v56
  %896 = vmatpush.msra.mxu0 %v53
  %897 = vmatpush.msra.mxu0 %v50
  %898 = vmatpush.msra.mxu0 %v47
  %899 = vmatpush.msra.mxu0 %v44
  %900 = vmatpush.msra.mxu0 %v41
  %901 = vmatpush.msra.mxu0 %v38
  %902 = vmatpush.msra.mxu0 %v35
  %903 = vmatpush.msra.mxu0 %v32
  %904 = vmatpush.msra.mxu0 %v29
  %905 = vmatpush.msra.mxu0 %v26
  %906 = vmatpush.msra.mxu0 %v23
  %907 = vmatpush.msra.mxu0 %v20
  %908 = vmatmul.f32.gmra.mxu0 %v865
  %v909 = vpop.f32.mrf.mxu0
  %v910 = vadd.f32 0.0, %v909
  %911 = vdwg.mxu0
  %912 = vmatpush.msra.mxu0 %v66
  %913 = vmatpush.msra.mxu0 %v63
  %914 = vmatpush.msra.mxu0 %v60
  %915 = vmatpush.msra.mxu0 %v57
  %916 = vmatpush.msra.mxu0 %v54
  %917 = vmatpush.msra.mxu0 %v51
  %918 = vmatpush.msra.mxu0 %v48
  %919 = vmatpush.msra.mxu0 %v45
  %920 = vmatpush.msra.mxu0 %v42
  %921 = vmatpush.msra.mxu0 %v39
  %922 = vmatpush.msra.mxu0 %v36
  %923 = vmatpush.msra.mxu0 %v33
  %924 = vmatpush.msra.mxu0 %v30
  %925 = vmatpush.msra.mxu0 %v27
  %926 = vmatpush.msra.mxu0 %v24
  %927 = vmatpush.msra.mxu0 %v21
  %928 = vmatmul.f32.gmra.mxu0 %v865
  %v929 = vpop.f32.mrf.mxu0
  %v930 = vadd.f32 0.0, %v929
  %931 = vdwg.mxu0
  %v932 = vadd.f32 %v869, %v890
  %v933 = vxor.u32 %v932, 2147483648
  %v934 = vmul.f32 %v933, 1.442695
  %v935 = vpow.pop %v934
  %v936 = vadd.f32 %v935, 1.0
  %v937 = vrcp.pop %v936
  %v938 = vmul.f32 %v936, %v937
  %v939 = vsub.f32 1.0, %v938
  %v940 = vmul.f32 %v937, %v939
  %v941 = vadd.f32 %v937, %v940
  %vm942 = vweird.f32 %v936
  %vm943 = vweird.f32 %v937
  %vm944 = vmor %vm942, %vm943
  %v945 = vsel %vm944, %v937, %v941
  %v946 = vand.u32 2147483647, %v936
  %vm947 = vcmp.eq.f32.partialorder %v946, 8.507059e+37
  %v948 = vand.u32 %v936, 2147483648
  %v949 = vor.u32 1.1754944e-38, %v948
  %v950 = vsel %vm947, %v949, %v945
  %v951 = vmul.f32 1.0, %v950
  %v952 = vadd.f32 %v870, %v910
  %v953 = vxor.u32 %v952, 2147483648
  %v954 = vmul.f32 %v953, 1.442695
  %v955 = vpow.pop %v954
  %v956 = vadd.f32 %v955, 1.0
  %v957 = vrcp.pop %v956
  %v958 = vmul.f32 %v956, %v957
  %v959 = vsub.f32 1.0, %v958
  %v960 = vmul.f32 %v957, %v959
  %v961 = vadd.f32 %v957, %v960
  %vm962 = vweird.f32 %v956
  %vm963 = vweird.f32 %v957
  %vm964 = vmor %vm962, %vm963
  %v965 = vsel %vm964, %v957, %v961
  %v966 = vand.u32 2147483647, %v956
  %vm967 = vcmp.eq.f32.partialorder %v966, 8.507059e+37
  %v968 = vand.u32 %v956, 2147483648
  %v969 = vor.u32 1.1754944e-38, %v968
  %v970 = vsel %vm967, %v969, %v965
  %v971 = vmul.f32 1.0, %v970
  %v972 = vadd.f32 %v930, %v69
  %v973 = vmul.f32 %v951, %v972
  %v974 = vadd.f32 %v871, %v973
  %v975 = vtanh.pop %v974
  %v976 = vsub.f32 1.0, %v971
  %v977 = vmul.f32 %v976, %v975
  %v978 = vmul.f32 %v971, %v865
  %v979 = vadd.f32 %v977, %v978
  %s980 = scalar_lea.vmem %s3, 56
  %981 = vst [vmem:[%s980] sm:$0xff] %v979
  %982 = vst [vmem:[#allocation2] sm:$0xff] %v979
  // Predicated region
  $region18: #{rnn_layer_forward.1} parent=0 // pred_check
    _
  $region19: #{rnn_layer_forward.1} parent=0 // pred_check_branch
    %984 = sbr.rel (0) target = $region21
  $region20: #{rnn_layer_forward.1} parent=0 // pred_region
    _
  $region21: #{rnn_layer_forward.1} parent=0 // pred_fallthru
    _
  // Predicated region
  $region22: #{rnn_layer_forward.1} parent=0 // pred_check
    _
  $region23: #{rnn_layer_forward.1} parent=0 // pred_check_branch
    %986 = sbr.rel (0) target = $region25
  $region24: #{rnn_layer_forward.1} parent=0 // pred_region
    _
  $region25: #{rnn_layer_forward.1} parent=0 // pred_fallthru
    _

</llo_original>
